<compile_context>
chip_gen: v7x
topology: tpu7x:2x2x1
jax: 0.10.0
libtpu: 0.0.40
codegen_flags: <defaults>
</compile_context>

<pallas_src>
import jax
import jax.numpy as jnp
from jax.experimental import pallas as pl
from jax.experimental.pallas import tpu as pltpu  # noqa: F401  (kept for TPU backend)

# ----------------------------- config ---------------------------------------
D_MODEL = 32
FFN_HIDDEN = 64
NUM_HEADS = 4
HEAD_DIM = D_MODEL // NUM_HEADS
SEQ = 8
BATCH = 2
LN_EPS = 1e-5

# per-head packed attention column block: [ Wq_h*scale | Wk_h | Wv_h @ Wo_h ]
ATTN_BLK = 2 * HEAD_DIM + D_MODEL          # 48
ATTN_COLS = NUM_HEADS * ATTN_BLK           # 192

# Packed weight slab, shape (2*D + F, ATTN_COLS) = (128, 192):
#   rows [0:D]        cols [h*48 : (h+1)*48] = per-head [q|k|v@Wo] block
#   rows [D:2D]       cols [0:F]             = W1 (ffn in)
#   rows [2D:2D+F]    cols [0:D]             = W2 (ffn out)
# Packed bias slab, shape (8, 192):
#   row 0 = packed qkv bias (q scaled, v folded through Wo), row 1 = bo,
#   row 2 = gamma1, row 3 = beta1, row 4 = b_ffn1, row 5 = b_ffn2,
#   row 6 = gamma2, row 7 = beta2


# ----------------------------- kernel ---------------------------------------
def encoder_layer_kernel(x_ref, mask_ref, w_ref, b_ref, o_ref):
    D, F, H, HD = D_MODEL, FFN_HIDDEN, NUM_HEADS, HEAD_DIM
    A = ATTN_BLK

    x = x_ref[...]                         # (N, D)   N = B*S tokens
    mask = mask_ref[...]                   # (H, N, N) additive (block-diag batch)
    w_attn = w_ref[0:D, :]                 # (D, H*A)
    w1 = w_ref[D:2 * D, 0:F]               # (D, F)
    w2 = w_ref[2 * D:2 * D + F, 0:D]       # (F, D)
    b = b_ref[...]                         # (8, H*A)

    # ---------------- multi-head self attention ----------------
    # One fused projection: per head the columns are [q*scale | k | v@Wo].
    qkv = jnp.dot(x, w_attn, preferred_element_type=jnp.float32) + b[0:1, :]

    # Stack heads on a leading batch axis: 4 static lane slices + 1 major concat.
    qkv_h = jnp.stack([qkv[:, h * A:(h + 1) * A] for h in range(H)], axis=0)
    q = qkv_h[:, :, 0:HD]                  # (H, N, HD)   scale already folded
    k = qkv_h[:, :, HD:2 * HD]             # (H, N, HD)
    v = qkv_h[:, :, 2 * HD:A]              # (H, N, D)    Wo already folded

    s = jnp.einsum("hqd,hkd->hqk", q, k,
                   preferred_element_type=jnp.float32) + mask   # (H, N, N)
    m = jnp.max(s, axis=-1, keepdims=True)
    e = jnp.exp(s - m)
    p = e * pl.reciprocal(jnp.sum(e, axis=-1, keepdims=True), approx=True)
    o = jnp.einsum("hqk,hkd->hqd", p, v,
                   preferred_element_type=jnp.float32)          # (H, N, D)

    attn = o[0]
    for h in range(1, H):                  # head outputs are already in model
        attn = attn + o[h]                 # dim -> just sum them
    attn = attn + b[1:2, 0:D]

    # dropout1 == identity (eval)
    # ---------------- add & layer-norm 1 ----------------
    h1 = attn + x
    mu1 = jnp.mean(h1, axis=-1, keepdims=True)
    var1 = jnp.mean((h1 - mu1) ** 2, axis=-1, keepdims=True)
    h1 = (h1 - mu1) * jax.lax.rsqrt(var1 + LN_EPS) * b[2:3, 0:D] + b[3:4, 0:D]

    # ---------------- position-wise FFN ----------------
    f = jnp.dot(h1, w1, preferred_element_type=jnp.float32) + b[4:5, 0:F]
    f = jnp.maximum(f, 0.0)                                     # ReLU
    # dropout inside FFN == identity (eval)
    f = jnp.dot(f, w2, preferred_element_type=jnp.float32) + b[5:6, 0:D]

    # dropout2 == identity (eval)
    # ---------------- add & layer-norm 2 ----------------
    h2 = f + h1
    mu2 = jnp.mean(h2, axis=-1, keepdims=True)
    var2 = jnp.mean((h2 - mu2) ** 2, axis=-1, keepdims=True)
    h2 = (h2 - mu2) * jax.lax.rsqrt(var2 + LN_EPS) * b[6:7, 0:D] + b[7:8, 0:D]

    o_ref[...] = h2


# ----------------------------- param packing --------------------------------
def _pack_params(params):
    (wqkv, bqkv, wo, bo, g1, be1, w1, bf1, w2, bf2, g2, be2) = params
    D, F, H, HD = D_MODEL, FFN_HIDDEN, NUM_HEADS, HEAD_DIM
    A, C = ATTN_BLK, ATTN_COLS
    scale = 1.0 / (float(HD) ** 0.5)

    # The module's qkv Linear follows the tutorial convention: output columns
    # interleaved per head as [q_h | k_h | v_h] (stride 3*HD).  NOTE: this is
    # NOT nn.MultiheadAttention's in_proj layout.
    assert wqkv.shape == (D, 3 * D), "expected interleaved-per-head qkv weight"
    assert wo.shape == (D, D)

    w_slab = jnp.zeros((2 * D + F, C), jnp.float32)
    b_slab = jnp.zeros((8, C), jnp.float32)

    for h in range(H):
        base = h * 3 * HD
        wq_h = wqkv[:, base:base + HD]
        wk_h = wqkv[:, base + HD:base + 2 * HD]
        wv_h = wqkv[:, base + 2 * HD:base + 3 * HD]
        bq_h = bqkv[0, base:base + HD]
        bk_h = bqkv[0, base + HD:base + 2 * HD]
        bv_h = bqkv[0, base + 2 * HD:base + 3 * HD]
        wo_h = wo[h * HD:(h + 1) * HD, :]                  # (HD, D)

        c0 = h * A
        w_slab = w_slab.at[0:D, c0:c0 + HD].set(wq_h * scale)       # scale fold
        w_slab = w_slab.at[0:D, c0 + HD:c0 + 2 * HD].set(wk_h)
        w_slab = w_slab.at[0:D, c0 + 2 * HD:c0 + A].set(wv_h @ wo_h)  # Wo fold
        b_slab = b_slab.at[0, c0:c0 + HD].set(bq_h * scale)
        b_slab = b_slab.at[0, c0 + HD:c0 + 2 * HD].set(bk_h)
        b_slab = b_slab.at[0, c0 + 2 * HD:c0 + A].set(bv_h @ wo_h)   # bias fold

    w_slab = w_slab.at[D:2 * D, 0:F].set(w1)
    w_slab = w_slab.at[2 * D:2 * D + F, 0:D].set(w2)

    b_slab = b_slab.at[1, 0:D].set(bo[0])
    b_slab = b_slab.at[2, 0:D].set(g1[0])
    b_slab = b_slab.at[3, 0:D].set(be1[0])
    b_slab = b_slab.at[4, 0:F].set(bf1[0])
    b_slab = b_slab.at[5, 0:D].set(bf2[0])
    b_slab = b_slab.at[6, 0:D].set(g2[0])
    b_slab = b_slab.at[7, 0:D].set(be2[0])
    return w_slab, b_slab


# ----------------------------- wrapper ---------------------------------------
def encoder_layer(x, mask, params):
    """Single grid step: the whole B*S token block is processed at once.
    (At these toy shapes any grid/batch split is pure overhead on v5e/v6e/v7x.)
    """
    B, S, D = x.shape
    N = B * S
    w_slab, b_slab = _pack_params(params)
    x_flat = x.reshape(N, D)               # rows grouped by batch

    # Merge the batch into the sequence axis: block-diagonal additive mask with
    # -1e9 on cross-batch entries (exp underflows to exactly 0 in f32), then
    # pre-tile over heads so the kernel does a plain add.
    big = jnp.full((B, S, B, S), -1e9, jnp.float32)
    big = big.at[jnp.arange(B), :, jnp.arange(B), :].set(mask)
    mask_big = big.reshape(N, N)
    mask_h = jnp.broadcast_to(mask_big[None], (NUM_HEADS, N, N))

    out = pl.pallas_call(
        encoder_layer_kernel,
        out_shape=jax.ShapeDtypeStruct((N, D), jnp.float32),
        grid=(1,),
        in_specs=[
            pl.BlockSpec((N, D), lambda g: (0, 0)),                  # tokens
            pl.BlockSpec((NUM_HEADS, N, N), lambda g: (0, 0, 0)),    # mask
            pl.BlockSpec(w_slab.shape, lambda g: (0, 0)),            # weight slab
            pl.BlockSpec(b_slab.shape, lambda g: (0, 0)),            # bias slab
        ],
        out_specs=pl.BlockSpec((N, D), lambda g: (0, 0)),
    )(x_flat, mask_h, w_slab, b_slab)
    return out.reshape(B, S, D)


# ----------------------------- reference (pure JAX) ---------------------------
def encoder_layer_ref(x, mask, params):
    (wqkv, bqkv, wo, bo, g1, be1, w1, bf1, w2, bf2, g2, be2) = params
    B, S, D = x.shape
    qkv = x @ wqkv + bqkv                                     # (B, S, 3D)
    qkv = qkv.reshape(B, S, NUM_HEADS, 3 * HEAD_DIM).transpose(0, 2, 1, 3)
    q, k, v = jnp.split(qkv, 3, axis=-1)                      # (B, H, S, hd)
    scores = jnp.einsum("bhqd,bhkd->bhqk", q, k) / jnp.sqrt(jnp.float32(HEAD_DIM))
    scores = scores + mask[:, None, :, :]
    attn = jax.nn.softmax(scores, axis=-1)
    vals = jnp.einsum("bhqk,bhkd->bhqd", attn, v)
    vals = vals.transpose(0, 2, 1, 3).reshape(B, S, D)
    attn_out = vals @ wo + bo

    def ln(t, g, b):
        mu = jnp.mean(t, axis=-1, keepdims=True)
        var = jnp.mean((t - mu) ** 2, axis=-1, keepdims=True)
        return (t - mu) * jax.lax.rsqrt(var + LN_EPS) * g + b

    h1 = ln(attn_out + x, g1, be1)
    f = jnp.maximum(h1 @ w1 + bf1, 0.0) @ w2 + bf2
    return ln(f + h1, g2, be2)


# ----------------------------- main ---------------------------------------
if __name__ == "__main__":
    key = jax.random.PRNGKey(0)
    ks = jax.random.split(key, 8)

    # deterministic parameter init (weights stored as (in, out); biases (1, out))
    wqkv = jax.random.normal(ks[0], (D_MODEL, 3 * D_MODEL), jnp.float32) * 0.02
    bqkv = jnp.zeros((1, 3 * D_MODEL), jnp.float32)
    wo = jax.random.normal(ks[1], (D_MODEL, D_MODEL), jnp.float32) * 0.02
    bo = jnp.zeros((1, D_MODEL), jnp.float32)
    g1 = jnp.ones((1, D_MODEL), jnp.float32)
    be1 = jnp.zeros((1, D_MODEL), jnp.float32)
    w1 = jax.random.normal(ks[2], (D_MODEL, FFN_HIDDEN), jnp.float32) * 0.02
    bf1 = jnp.zeros((1, FFN_HIDDEN), jnp.float32)
    w2 = jax.random.normal(ks[3], (FFN_HIDDEN, D_MODEL), jnp.float32) * 0.02
    bf2 = jnp.zeros((1, D_MODEL), jnp.float32)
    g2 = jnp.ones((1, D_MODEL), jnp.float32)
    be2 = jnp.zeros((1, D_MODEL), jnp.float32)
    params = [wqkv, bqkv, wo, bo, g1, be1, w1, bf1, w2, bf2, g2, be2]

    # inputs
    x = jax.random.normal(ks[4], (BATCH, SEQ, D_MODEL), jnp.float32)
    causal = jnp.tril(jnp.ones((SEQ, SEQ), jnp.bool_))
    mask = jnp.where(causal, 0.0, -1e9).astype(jnp.float32)
    mask = jnp.broadcast_to(mask, (BATCH, SEQ, SEQ))

    out = encoder_layer(x, mask, params)
    out = jax.block_until_ready(out)

    ref = encoder_layer_ref(x, mask, params)
    assert out.shape == (BATCH, SEQ, D_MODEL)
    # tolerance loosened slightly for pl.reciprocal(approx=True) in softmax
    assert jnp.allclose(out, ref, atol=1e-3, rtol=1e-3), float(
        jnp.max(jnp.abs(out - ref)))

    print("KERNEL_OK")
</pallas_src>

<mosaic_0001>
module attributes {stable_mosaic.version = 11 : i64} {
  func.func @encoder_layer_kernel(%arg0: i32, %arg1: memref<16x32xf32, #tpu.memory_space<vmem>>, %arg2: memref<4x16x16xf32, #tpu.memory_space<vmem>>, %arg3: memref<128x192xf32, #tpu.memory_space<vmem>>, %arg4: memref<8x192xf32, #tpu.memory_space<vmem>>, %arg5: memref<16x32xf32, #tpu.memory_space<vmem>>) attributes {dimension_semantics = [#tpu.dimension_semantics<arbitrary>], iteration_bounds = array<i64: 1>, scalar_prefetch = 0 : i64, scratch_operands = 0 : i64, tpu.core_type = #tpu.core_type<tc>, window_params = [{pipeline_mode = #tpu.pipeline_mode<synchronous>, transform_indices = @transform_0, window_bounds = array<i64: 16, 32>}, {pipeline_mode = #tpu.pipeline_mode<synchronous>, transform_indices = @transform_1, window_bounds = array<i64: 4, 16, 16>}, {pipeline_mode = #tpu.pipeline_mode<synchronous>, transform_indices = @transform_2, window_bounds = array<i64: 128, 192>}, {pipeline_mode = #tpu.pipeline_mode<synchronous>, transform_indices = @transform_3, window_bounds = array<i64: 8, 192>}, {pipeline_mode = #tpu.pipeline_mode<synchronous>, transform_indices = @transform_4, window_bounds = array<i64: 16, 32>}]} {
    %c0 = arith.constant 0 : index
    %c0_0 = arith.constant 0 : index
    %0 = vector.load %arg1[%c0, %c0_0] : memref<16x32xf32, #tpu.memory_space<vmem>>, vector<16x32xf32>
    %c0_1 = arith.constant 0 : index
    %c0_2 = arith.constant 0 : index
    %c0_3 = arith.constant 0 : index
    %1 = vector.load %arg2[%c0_1, %c0_2, %c0_3] : memref<4x16x16xf32, #tpu.memory_space<vmem>>, vector<4x16x16xf32>
    %c0_4 = arith.constant 0 : index
    %c0_5 = arith.constant 0 : index
    %2 = vector.load %arg3[%c0_4, %c0_5] : memref<128x192xf32, #tpu.memory_space<vmem>>, vector<32x192xf32>
    %c32 = arith.constant 32 : index
    %c0_6 = arith.constant 0 : index
    %3 = vector.load %arg3[%c32, %c0_6] : memref<128x192xf32, #tpu.memory_space<vmem>>, vector<32x64xf32>
    %c64 = arith.constant 64 : index
    %c0_7 = arith.constant 0 : index
    %4 = vector.load %arg3[%c64, %c0_7] : memref<128x192xf32, #tpu.memory_space<vmem>>, vector<64x32xf32>
    %c0_8 = arith.constant 0 : index
    %c0_9 = arith.constant 0 : index
    %5 = vector.load %arg4[%c0_8, %c0_9] : memref<8x192xf32, #tpu.memory_space<vmem>>, vector<8x192xf32>
    %cst = arith.constant dense<0.000000e+00> : vector<16x192xf32>
    %6 = tpu.matmul %0, %2, %cst {dimension_numbers = #tpu.dot_dimension_numbers<[1], [0], [0], [1], [0, 0, 1, 1], [], []>} : vector<16x32xf32>, vector<32x192xf32>, vector<16x192xf32> -> vector<16x192xf32>
    %7 = vector.extract_strided_slice %5 {offsets = [0, 0], sizes = [1, 192], strides = [1, 1]} : vector<8x192xf32> to vector<1x192xf32>
    %8 = vector.broadcast %7 : vector<1x192xf32> to vector<16x192xf32>
    %9 = arith.addf %6, %8 : vector<16x192xf32>
    %10 = vector.extract_strided_slice %9 {offsets = [0, 0], sizes = [16, 48], strides = [1, 1]} : vector<16x192xf32> to vector<16x48xf32>
    %11 = vector.extract_strided_slice %9 {offsets = [0, 48], sizes = [16, 48], strides = [1, 1]} : vector<16x192xf32> to vector<16x48xf32>
    %12 = vector.extract_strided_slice %9 {offsets = [0, 96], sizes = [16, 48], strides = [1, 1]} : vector<16x192xf32> to vector<16x48xf32>
    %13 = vector.extract_strided_slice %9 {offsets = [0, 144], sizes = [16, 48], strides = [1, 1]} : vector<16x192xf32> to vector<16x48xf32>
    %14 = vector.shape_cast %10 : vector<16x48xf32> to vector<1x16x48xf32>
    %15 = vector.shape_cast %11 : vector<16x48xf32> to vector<1x16x48xf32>
    %16 = vector.shape_cast %12 : vector<16x48xf32> to vector<1x16x48xf32>
    %17 = vector.shape_cast %13 : vector<16x48xf32> to vector<1x16x48xf32>
    %18 = tpu.concatenate %14, %15, %16, %17 in 0 : vector<1x16x48xf32>, vector<1x16x48xf32>, vector<1x16x48xf32>, vector<1x16x48xf32> -> vector<4x16x48xf32>
    %19 = vector.extract_strided_slice %18 {offsets = [0, 0, 0], sizes = [4, 16, 8], strides = [1, 1, 1]} : vector<4x16x48xf32> to vector<4x16x8xf32>
    %20 = vector.extract_strided_slice %18 {offsets = [0, 0, 8], sizes = [4, 16, 8], strides = [1, 1, 1]} : vector<4x16x48xf32> to vector<4x16x8xf32>
    %21 = vector.extract_strided_slice %18 {offsets = [0, 0, 16], sizes = [4, 16, 32], strides = [1, 1, 1]} : vector<4x16x48xf32> to vector<4x16x32xf32>
    "tpu.trace_start"() <{level = 10 : i32, message = "hqd,hkd->hqk"}> : () -> ()
    %cst_10 = arith.constant dense<0.000000e+00> : vector<4x16x16xf32>
    %22 = tpu.matmul %19, %20, %cst_10 {dimension_numbers = #tpu.dot_dimension_numbers<[2], [2], [1], [1], [0, 0, 0, 1, 1, 1], [0], [0]>} : vector<4x16x8xf32>, vector<4x16x8xf32>, vector<4x16x16xf32> -> vector<4x16x16xf32>
    "tpu.trace_stop"() : () -> ()
    %23 = arith.addf %22, %1 : vector<4x16x16xf32>
    %cst_11 = arith.constant dense<0xFF800000> : vector<4x16xf32>
    %24 = vector.multi_reduction <maximumf>, %23, %cst_11 [2] : vector<4x16x16xf32> to vector<4x16xf32>
    %25 = vector.shape_cast %24 : vector<4x16xf32> to vector<4x16x1xf32>
    %26 = vector.broadcast %25 : vector<4x16x1xf32> to vector<4x16x16xf32>
    %27 = arith.subf %23, %26 : vector<4x16x16xf32>
    %28 = math.exp %27 : vector<4x16x16xf32>
    %cst_12 = arith.constant dense<0.000000e+00> : vector<4x16xf32>
    %29 = vector.multi_reduction <add>, %28, %cst_12 [2] : vector<4x16x16xf32> to vector<4x16xf32>
    %30 = vector.shape_cast %29 : vector<4x16xf32> to vector<4x16x1xf32>
    %31 = tpu.reciprocal %30 {approx = true} : vector<4x16x1xf32> -> vector<4x16x1xf32>
    %32 = vector.broadcast %31 : vector<4x16x1xf32> to vector<4x16x16xf32>
    %33 = arith.mulf %28, %32 : vector<4x16x16xf32>
    "tpu.trace_start"() <{level = 10 : i32, message = "hqk,hkd->hqd"}> : () -> ()
    %cst_13 = arith.constant dense<0.000000e+00> : vector<4x16x32xf32>
    %34 = tpu.matmul %33, %21, %cst_13 {dimension_numbers = #tpu.dot_dimension_numbers<[2], [1], [1], [2], [0, 0, 0, 1, 1, 2], [0], [0]>} : vector<4x16x16xf32>, vector<4x16x32xf32>, vector<4x16x32xf32> -> vector<4x16x32xf32>
    "tpu.trace_stop"() : () -> ()
    %35 = vector.extract_strided_slice %34 {offsets = [0, 0, 0], sizes = [1, 16, 32], strides = [1, 1, 1]} : vector<4x16x32xf32> to vector<1x16x32xf32>
    %36 = vector.shape_cast %35 : vector<1x16x32xf32> to vector<16x32xf32>
    %37 = vector.extract_strided_slice %34 {offsets = [1, 0, 0], sizes = [1, 16, 32], strides = [1, 1, 1]} : vector<4x16x32xf32> to vector<1x16x32xf32>
    %38 = vector.shape_cast %37 : vector<1x16x32xf32> to vector<16x32xf32>
    %39 = arith.addf %36, %38 : vector<16x32xf32>
    %40 = vector.extract_strided_slice %34 {offsets = [2, 0, 0], sizes = [1, 16, 32], strides = [1, 1, 1]} : vector<4x16x32xf32> to vector<1x16x32xf32>
    %41 = vector.shape_cast %40 : vector<1x16x32xf32> to vector<16x32xf32>
    %42 = arith.addf %39, %41 : vector<16x32xf32>
    %43 = vector.extract_strided_slice %34 {offsets = [3, 0, 0], sizes = [1, 16, 32], strides = [1, 1, 1]} : vector<4x16x32xf32> to vector<1x16x32xf32>
    %44 = vector.shape_cast %43 : vector<1x16x32xf32> to vector<16x32xf32>
    %45 = arith.addf %42, %44 : vector<16x32xf32>
    %46 = vector.extract_strided_slice %5 {offsets = [1, 0], sizes = [1, 32], strides = [1, 1]} : vector<8x192xf32> to vector<1x32xf32>
    %47 = vector.broadcast %46 : vector<1x32xf32> to vector<16x32xf32>
    %48 = arith.addf %45, %47 : vector<16x32xf32>
    %49 = arith.addf %48, %0 : vector<16x32xf32>
    %cst_14 = arith.constant dense<0.000000e+00> : vector<16xf32>
    %50 = vector.multi_reduction <add>, %49, %cst_14 [1] : vector<16x32xf32> to vector<16xf32>
    %51 = vector.shape_cast %50 : vector<16xf32> to vector<16x1xf32>
    %cst_15 = arith.constant 3.200000e+01 : f32
    %52 = vector.broadcast %cst_15 : f32 to vector<16x1xf32>
    %53 = arith.divf %51, %52 : vector<16x1xf32>
    %54 = vector.broadcast %53 : vector<16x1xf32> to vector<16x32xf32>
    %55 = arith.subf %49, %54 : vector<16x32xf32>
    %56 = arith.mulf %55, %55 : vector<16x32xf32>
    %cst_16 = arith.constant dense<0.000000e+00> : vector<16xf32>
    %57 = vector.multi_reduction <add>, %56, %cst_16 [1] : vector<16x32xf32> to vector<16xf32>
    %58 = vector.shape_cast %57 : vector<16xf32> to vector<16x1xf32>
    %cst_17 = arith.constant 3.200000e+01 : f32
    %59 = vector.broadcast %cst_17 : f32 to vector<16x1xf32>
    %60 = arith.divf %58, %59 : vector<16x1xf32>
    %61 = vector.broadcast %53 : vector<16x1xf32> to vector<16x32xf32>
    %62 = arith.subf %49, %61 : vector<16x32xf32>
    %cst_18 = arith.constant 9.99999974E-6 : f32
    %63 = vector.broadcast %cst_18 : f32 to vector<16x1xf32>
    %64 = arith.addf %60, %63 : vector<16x1xf32>
    %65 = math.rsqrt %64 : vector<16x1xf32>
    %66 = vector.broadcast %65 : vector<16x1xf32> to vector<16x32xf32>
    %67 = arith.mulf %62, %66 : vector<16x32xf32>
    %68 = vector.extract_strided_slice %5 {offsets = [2, 0], sizes = [1, 32], strides = [1, 1]} : vector<8x192xf32> to vector<1x32xf32>
    %69 = vector.broadcast %68 : vector<1x32xf32> to vector<16x32xf32>
    %70 = arith.mulf %67, %69 : vector<16x32xf32>
    %71 = vector.extract_strided_slice %5 {offsets = [3, 0], sizes = [1, 32], strides = [1, 1]} : vector<8x192xf32> to vector<1x32xf32>
    %72 = vector.broadcast %71 : vector<1x32xf32> to vector<16x32xf32>
    %73 = arith.addf %70, %72 : vector<16x32xf32>
    %cst_19 = arith.constant dense<0.000000e+00> : vector<16x64xf32>
    %74 = tpu.matmul %73, %3, %cst_19 {dimension_numbers = #tpu.dot_dimension_numbers<[1], [0], [0], [1], [0, 0, 1, 1], [], []>} : vector<16x32xf32>, vector<32x64xf32>, vector<16x64xf32> -> vector<16x64xf32>
    %75 = vector.extract_strided_slice %5 {offsets = [4, 0], sizes = [1, 64], strides = [1, 1]} : vector<8x192xf32> to vector<1x64xf32>
    %76 = vector.broadcast %75 : vector<1x64xf32> to vector<16x64xf32>
    %77 = arith.addf %74, %76 : vector<16x64xf32>
    %cst_20 = arith.constant 0.000000e+00 : f32
    %78 = vector.broadcast %cst_20 : f32 to vector<16x64xf32>
    %79 = arith.maximumf %77, %78 : vector<16x64xf32>
    %cst_21 = arith.constant dense<0.000000e+00> : vector<16x32xf32>
    %80 = tpu.matmul %79, %4, %cst_21 {dimension_numbers = #tpu.dot_dimension_numbers<[1], [0], [0], [1], [0, 0, 1, 1], [], []>} : vector<16x64xf32>, vector<64x32xf32>, vector<16x32xf32> -> vector<16x32xf32>
    %81 = vector.extract_strided_slice %5 {offsets = [5, 0], sizes = [1, 32], strides = [1, 1]} : vector<8x192xf32> to vector<1x32xf32>
    %82 = vector.broadcast %81 : vector<1x32xf32> to vector<16x32xf32>
    %83 = arith.addf %80, %82 : vector<16x32xf32>
    %84 = arith.addf %83, %73 : vector<16x32xf32>
    %cst_22 = arith.constant dense<0.000000e+00> : vector<16xf32>
    %85 = vector.multi_reduction <add>, %84, %cst_22 [1] : vector<16x32xf32> to vector<16xf32>
    %86 = vector.shape_cast %85 : vector<16xf32> to vector<16x1xf32>
    %cst_23 = arith.constant 3.200000e+01 : f32
    %87 = vector.broadcast %cst_23 : f32 to vector<16x1xf32>
    %88 = arith.divf %86, %87 : vector<16x1xf32>
    %89 = vector.broadcast %88 : vector<16x1xf32> to vector<16x32xf32>
    %90 = arith.subf %84, %89 : vector<16x32xf32>
    %91 = arith.mulf %90, %90 : vector<16x32xf32>
    %cst_24 = arith.constant dense<0.000000e+00> : vector<16xf32>
    %92 = vector.multi_reduction <add>, %91, %cst_24 [1] : vector<16x32xf32> to vector<16xf32>
    %93 = vector.shape_cast %92 : vector<16xf32> to vector<16x1xf32>
    %cst_25 = arith.constant 3.200000e+01 : f32
    %94 = vector.broadcast %cst_25 : f32 to vector<16x1xf32>
    %95 = arith.divf %93, %94 : vector<16x1xf32>
    %96 = vector.broadcast %88 : vector<16x1xf32> to vector<16x32xf32>
    %97 = arith.subf %84, %96 : vector<16x32xf32>
    %cst_26 = arith.constant 9.99999974E-6 : f32
    %98 = vector.broadcast %cst_26 : f32 to vector<16x1xf32>
    %99 = arith.addf %95, %98 : vector<16x1xf32>
    %100 = math.rsqrt %99 : vector<16x1xf32>
    %101 = vector.broadcast %100 : vector<16x1xf32> to vector<16x32xf32>
    %102 = arith.mulf %97, %101 : vector<16x32xf32>
    %103 = vector.extract_strided_slice %5 {offsets = [6, 0], sizes = [1, 32], strides = [1, 1]} : vector<8x192xf32> to vector<1x32xf32>
    %104 = vector.broadcast %103 : vector<1x32xf32> to vector<16x32xf32>
    %105 = arith.mulf %102, %104 : vector<16x32xf32>
    %106 = vector.extract_strided_slice %5 {offsets = [7, 0], sizes = [1, 32], strides = [1, 1]} : vector<8x192xf32> to vector<1x32xf32>
    %107 = vector.broadcast %106 : vector<1x32xf32> to vector<16x32xf32>
    %108 = arith.addf %105, %107 : vector<16x32xf32>
    %c0_27 = arith.constant 0 : index
    %c0_28 = arith.constant 0 : index
    %109 = vector.load %arg5[%c0_27, %c0_28] : memref<16x32xf32, #tpu.memory_space<vmem>>, vector<16x32xf32>
    tpu.vector_store %arg5[%c0_27, %c0_28], %108 {strides = array<i32>} : memref<16x32xf32, #tpu.memory_space<vmem>>, vector<16x32xf32>,
    return
  }
  func.func @transform_0(%arg0: i32) -> (i32, i32) {
    %c0_i32 = arith.constant 0 : i32
    %c0_i32_0 = arith.constant 0 : i32
    %c0_i32_1 = arith.constant 0 : i32
    return %c0_i32, %c0_i32_0 : i32, i32
  }
  func.func @transform_1(%arg0: i32) -> (i32, i32, i32) {
    %c0_i32 = arith.constant 0 : i32
    %c0_i32_0 = arith.constant 0 : i32
    %c0_i32_1 = arith.constant 0 : i32
    %c0_i32_2 = arith.constant 0 : i32
    return %c0_i32, %c0_i32_0, %c0_i32_1 : i32, i32, i32
  }
  func.func @transform_2(%arg0: i32) -> (i32, i32) {
    %c0_i32 = arith.constant 0 : i32
    %c0_i32_0 = arith.constant 0 : i32
    %c0_i32_1 = arith.constant 0 : i32
    return %c0_i32, %c0_i32_0 : i32, i32
  }
  func.func @transform_3(%arg0: i32) -> (i32, i32) {
    %c0_i32 = arith.constant 0 : i32
    %c0_i32_0 = arith.constant 0 : i32
    %c0_i32_1 = arith.constant 0 : i32
    return %c0_i32, %c0_i32_0 : i32, i32
  }
  func.func @transform_4(%arg0: i32) -> (i32, i32) {
    %c0_i32 = arith.constant 0 : i32
    %c0_i32_0 = arith.constant 0 : i32
    %c0_i32_1 = arith.constant 0 : i32
    return %c0_i32, %c0_i32_0 : i32, i32
  }
}

</mosaic_0001>

<llo_original>
// kernel: tpu_custom_call.1
$region0: #{tpu_custom_call.1}
  #allocation0 [shape = 'u32[]', space=smem, size = 0x4, offset = 0x4, fixed_abs, tag = 'smem constant byte address 0x4 - core index']
  #allocation1 [shape = 'u32[144,128]{1,0:T(1,128)}', space=vmem, size = 0x12000, scoped, tag = 'internal scratch']
  %s0 = inlined_call_operand.vmem [shape: f32[16,32], index: 0, kind: input, shape index: {}]
  %s1 = inlined_call_operand.vmem [shape: f32[4,16,16], index: 1, kind: input, shape index: {}]
  %s2 = inlined_call_operand.vmem [shape: f32[128,192], index: 2, kind: input, shape index: {}]
  %s3 = inlined_call_operand.vmem [shape: f32[8,192], index: 3, kind: input, shape index: {}]
  %s4 = inlined_call_operand.hbm [shape: f32[16,32], index: 4, kind: output, shape index: {}]
  %s5 = sld [smem:[#allocation0]]
  $region26: #{tpu_custom_call.1} parent=0
    _
  %s7 = ssub.s32 1, %s5
  %s8 = scalar_select 0, %s7, %s5
  $region1: #{tpu_custom_call.1} parent=0
    #allocation2 [shape = 'u8[8192]{0}', space=vmem, size = 0x2000, scoped, tag = 'output window, operand 0, single buffered']
    #allocation3 [shape = 's32[1]{0}', space=sflag, size = 0x4, scoped, tag = 'scoped memory for tpu_custom_call.1']
    %9 = vsyncpa [#allocation3], 0
    // Predicated region
    $region2: #{tpu_custom_call.1} parent=1 // pred_check
      _
    $region3: #{tpu_custom_call.1} parent=1 // pred_check_branch
      %11 = sbr.rel (0) target = $region5
    $region4: #{tpu_custom_call.1} parent=1 // pred_region
      _
    $region5: #{tpu_custom_call.1} parent=1 // pred_fallthru
      _
    // Predicated region
    $region6: #{tpu_custom_call.1} parent=1 // pred_check
      _
    $region7: #{tpu_custom_call.1} parent=1 // pred_check_branch
      %13 = sbr.rel (0) target = $region9
    $region8: #{tpu_custom_call.1} parent=1 // pred_region
      _
    $region9: #{tpu_custom_call.1} parent=1 // pred_fallthru
      _
    // Predicated region
    $region10: #{tpu_custom_call.1} parent=1 // pred_check
      _
    $region11: #{tpu_custom_call.1} parent=1 // pred_check_branch
      %15 = sbr.rel (0) target = $region13
    $region12: #{tpu_custom_call.1} parent=1 // pred_region
      _
    $region13: #{tpu_custom_call.1} parent=1 // pred_fallthru
      _
    // Predicated region
    $region14: #{tpu_custom_call.1} parent=1 // pred_check
      _
    $region15: #{tpu_custom_call.1} parent=1 // pred_check_branch
      %17 = sbr.rel (0) target = $region17
    $region16: #{tpu_custom_call.1} parent=1 // pred_region
      _
    $region17: #{tpu_custom_call.1} parent=1 // pred_fallthru
      _
    %v18 = vld [vmem:[%s0] sm:$0xff]
    %v19 = vld [vmem:[%s0 + $0x8] sm:$0xff]
    %v20 = vld [vmem:[%s1] sm:$0xff]
    %v21 = vld [vmem:[%s1 + $0x8] sm:$0xff]
    %v22 = vld [vmem:[%s1 + $0x10] sm:$0xff]
    %v23 = vld [vmem:[%s1 + $0x18] sm:$0xff]
    %v24 = vld [vmem:[%s1 + $0x20] sm:$0xff]
    %v25 = vld [vmem:[%s1 + $0x28] sm:$0xff]
    %v26 = vld [vmem:[%s1 + $0x30] sm:$0xff]
    %v27 = vld [vmem:[%s1 + $0x38] sm:$0xff]
    %v28 = vld [vmem:[%s2] sm:$0xff]
    %v29 = vld [vmem:[%s2 + $0x8] sm:$0xff]
    %v30 = vld [vmem:[%s2 + $0x10] sm:$0xff]
    %v31 = vld [vmem:[%s2 + $0x18] sm:$0xff]
    %v32 = vld [vmem:[%s2 + $0x20] sm:$0xff]
    %v33 = vld [vmem:[%s2 + $0x28] sm:$0xff]
    %v34 = vld [vmem:[%s2 + $0x30] sm:$0xff]
    %v35 = vld [vmem:[%s2 + $0x38] sm:$0xff]
    %v36 = vld [vmem:[%s2 + $0x40] sm:$0xff]
    %v37 = vld [vmem:[%s2 + $0x50] sm:$0xff]
    %v38 = vld [vmem:[%s2 + $0x60] sm:$0xff]
    %v39 = vld [vmem:[%s2 + $0x70] sm:$0xff]
    %v40 = vld [vmem:[%s2 + $0x80] sm:$0xff]
    %v41 = vld [vmem:[%s2 + $0x90] sm:$0xff]
    %v42 = vld [vmem:[%s2 + $0xa0] sm:$0xff]
    %v43 = vld [vmem:[%s2 + $0xb0] sm:$0xff]
    %v44 = vld [vmem:[%s2 + $0xc0] sm:$0xff]
    %v45 = vld [vmem:[%s2 + $0xd0] sm:$0xff]
    %v46 = vld [vmem:[%s2 + $0xe0] sm:$0xff]
    %v47 = vld [vmem:[%s2 + $0xf0] sm:$0xff]
    %v48 = vld [vmem:[%s3] sm:$0xff]
    %v49 = vld [vmem:[%s3 + $0x8] sm:$0xff]
    %v50 = vlaneseq
    %v51 = vshrl.u32 %v50, 7
    %v52 = vsub.s32 0, %v51
    %v53 = vrot.slane %v48, %v52
    %v54 = vlaneseq
    %v55 = vshrl.u32 %v54, 7
    %v56 = vsub.s32 0, %v55
    %v57 = vrot.slane %v49, %v56
    %vm58 = vcmask 261120
    %v60 = vsel %vm58, %v18, 0
    %v63 = vsel %vm58, %v19, 0
    %65 = vmatprep.subr.mxu0 %v29
    %66 = vmatpush1.msra.mxu0 %v28
    %67 = vmatprep.subr.mxu0 %v31
    %68 = vmatpush1.msra.mxu0 %v30
    %69 = vmatprep.subr.mxu0 %v33
    %70 = vmatpush1.msra.mxu0 %v32
    %71 = vmatprep.subr.mxu0 %v35
    %72 = vmatpush1.msra.mxu0 %v34
    %73 = vmatprep.subr.mxu0 0.0
    %74 = vmatpush1.msra.mxu0 0.0
    %75 = vmatprep.subr.mxu0 0.0
    %76 = vmatpush1.msra.mxu0 0.0
    %77 = vmatprep.subr.mxu0 0.0
    %78 = vmatpush1.msra.mxu0 0.0
    %79 = vmatprep.subr.mxu0 0.0
    %80 = vmatpush1.msra.mxu0 0.0
    %81 = vmatprep.subr.mxu0 0.0
    %82 = vmatpush1.msra.mxu0 0.0
    %83 = vmatprep.subr.mxu0 0.0
    %84 = vmatpush1.msra.mxu0 0.0
    %85 = vmatprep.subr.mxu0 0.0
    %86 = vmatpush1.msra.mxu0 0.0
    %87 = vmatprep.subr.mxu0 0.0
    %88 = vmatpush1.msra.mxu0 0.0
    %89 = vmatprep.subr.mxu0 0.0
    %90 = vmatpush1.msra.mxu0 0.0
    %91 = vmatprep.subr.mxu0 0.0
    %92 = vmatpush1.msra.mxu0 0.0
    %93 = vmatprep.subr.mxu0 0.0
    %94 = vmatpush1.msra.mxu0 0.0
    %95 = vmatprep.subr.mxu0 0.0
    %96 = vmatpush1.msra.mxu0 0.0
    %97 = vmatprep.subr.mxu0 0.0
    %98 = vmatpush1.msra.mxu0 0.0
    %99 = vmatprep.subr.mxu0 0.0
    %100 = vmatpush1.msra.mxu0 0.0
    %101 = vmatprep.subr.mxu0 0.0
    %102 = vmatpush1.msra.mxu0 0.0
    %103 = vmatprep.subr.mxu0 0.0
    %104 = vmatpush1.msra.mxu0 0.0
    %105 = vmatprep.subr.mxu0 0.0
    %106 = vmatpush1.msra.mxu0 0.0
    %107 = vmatprep.subr.mxu0 0.0
    %108 = vmatpush1.msra.mxu0 0.0
    %109 = vmatprep.subr.mxu0 0.0
    %110 = vmatpush1.msra.mxu0 0.0
    %111 = vmatprep.subr.mxu0 0.0
    %112 = vmatpush1.msra.mxu0 0.0
    %113 = vmatprep.subr.mxu0 0.0
    %114 = vmatpush1.msra.mxu0 0.0
    %115 = vmatprep.subr.mxu0 0.0
    %116 = vmatpush1.msra.mxu0 0.0
    %117 = vmatprep.subr.mxu0 0.0
    %118 = vmatpush1.msra.mxu0 0.0
    %119 = vmatprep.subr.mxu0 0.0
    %120 = vmatpush1.msra.mxu0 0.0
    %121 = vmatprep.subr.mxu0 0.0
    %122 = vmatpush1.msra.mxu0 0.0
    %123 = vmatprep.subr.mxu0 0.0
    %124 = vmatpush1.msra.mxu0 0.0
    %125 = vmatprep.subr.mxu0 0.0
    %126 = vmatpush1.msra.mxu0 0.0
    %127 = vmatprep.subr.mxu0 0.0
    %128 = vmatpush1.msra.mxu0 0.0
    %129 = vmatprep.mubr.f32.mxu0 0.0
    %130 = vmatmul.mubr.f32.gmra.mrb[0].mxu0 %v60
    %v131 = vpop.f32.mrb[0].mxu0
    %v132 = vadd.f32 %v53, %v131
    %v133 = vpop.f32.mrb[0].mxu0
    %v134 = vadd.f32 %v57, %v133
    %135 = vmatprep.mubr.f32.mxu0 0.0
    %136 = vmatmul.mubr.f32.gmra.mrb[0].mxu0 %v63
    %v137 = vpop.f32.mrb[0].mxu0
    %v138 = vadd.f32 %v53, %v137
    %v139 = vpop.f32.mrb[0].mxu0
    %v140 = vadd.f32 %v57, %v139
    %141 = vdwg.mxu0
    %144 = vrot.lane.b32.xlu0 %v132, 80
    %v145 = vpop.permute.xlu0 %144
    %146 = vrot.lane.b32.xlu0 %v138, 80
    %v147 = vpop.permute.xlu0 %146
    %150 = vrot.lane.b32.xlu0 %v132, 32
    %v151 = vpop.permute.xlu0 %150
    %152 = vrot.lane.b32.xlu0 %v134, 32
    %v153 = vpop.permute.xlu0 %152
    %154 = vrot.lane.b32.xlu0 %v138, 32
    %v155 = vpop.permute.xlu0 %154
    %156 = vrot.lane.b32.xlu0 %v140, 32
    %v157 = vpop.permute.xlu0 %156
    %v158 = vsel %vm58, %v151, %v153
    %v159 = vsel %vm58, %v155, %v157
    %160 = vrot.lane.b32.xlu0 %v134, 112
    %v161 = vpop.permute.xlu0 %160
    %162 = vrot.lane.b32.xlu0 %v140, 112
    %v163 = vpop.permute.xlu0 %162
    %164 = vrot.lane.b32.xlu0 %v132, 120
    %v165 = vpop.permute.xlu0 %164
    %166 = vrot.lane.b32.xlu0 %v138, 120
    %v167 = vpop.permute.xlu0 %166
    %vm168 = vcmask 64512
    %v169 = vsel %vm168, %v132, 0
    %v171 = vsel %vm168, %v138, 0
    %v173 = vsel %vm168, %v165, 0
    %v175 = vsel %vm168, %v167, 0
    %177 = vmatprep.subr.mxu0 0.0
    %178 = vmatpush1.xpose.msra.mxu0 %v173
    %179 = vmatprep.subr.mxu0 0.0
    %180 = vmatpush1.xpose.msra.mxu0 %v175
    %181 = vmatprep.subr.mxu0 0.0
    %182 = vmatpush1.xpose.msra.mxu0 0.0
    %183 = vmatprep.subr.mxu0 0.0
    %184 = vmatpush1.xpose.msra.mxu0 0.0
    %185 = vmatprep.subr.mxu0 0.0
    %186 = vmatpush1.xpose.msra.mxu0 0.0
    %187 = vmatprep.subr.mxu0 0.0
    %188 = vmatpush1.xpose.msra.mxu0 0.0
    %189 = vmatprep.subr.mxu0 0.0
    %190 = vmatpush1.xpose.msra.mxu0 0.0
    %191 = vmatprep.subr.mxu0 0.0
    %192 = vmatpush1.xpose.msra.mxu0 0.0
    %193 = vmatprep.subr.mxu0 0.0
    %194 = vmatpush1.xpose.msra.mxu0 0.0
    %195 = vmatprep.subr.mxu0 0.0
    %196 = vmatpush1.xpose.msra.mxu0 0.0
    %197 = vmatprep.subr.mxu0 0.0
    %198 = vmatpush1.xpose.msra.mxu0 0.0
    %199 = vmatprep.subr.mxu0 0.0
    %200 = vmatpush1.xpose.msra.mxu0 0.0
    %201 = vmatprep.subr.mxu0 0.0
    %202 = vmatpush1.xpose.msra.mxu0 0.0
    %203 = vmatprep.subr.mxu0 0.0
    %204 = vmatpush1.xpose.msra.mxu0 0.0
    %205 = vmatprep.subr.mxu0 0.0
    %206 = vmatpush1.xpose.msra.mxu0 0.0
    %207 = vmatprep.subr.mxu0 0.0
    %208 = vmatpush1.xpose.msra.mxu0 0.0
    %209 = vmatprep.subr.mxu0 0.0
    %210 = vmatpush1.xpose.msra.mxu0 0.0
    %211 = vmatprep.subr.mxu0 0.0
    %212 = vmatpush1.xpose.msra.mxu0 0.0
    %213 = vmatprep.subr.mxu0 0.0
    %214 = vmatpush1.xpose.msra.mxu0 0.0
    %215 = vmatprep.subr.mxu0 0.0
    %216 = vmatpush1.xpose.msra.mxu0 0.0
    %217 = vmatprep.subr.mxu0 0.0
    %218 = vmatpush1.xpose.msra.mxu0 0.0
    %219 = vmatprep.subr.mxu0 0.0
    %220 = vmatpush1.xpose.msra.mxu0 0.0
    %221 = vmatprep.subr.mxu0 0.0
    %222 = vmatpush1.xpose.msra.mxu0 0.0
    %223 = vmatprep.subr.mxu0 0.0
    %224 = vmatpush1.xpose.msra.mxu0 0.0
    %225 = vmatprep.subr.mxu0 0.0
    %226 = vmatpush1.xpose.msra.mxu0 0.0
    %227 = vmatprep.subr.mxu0 0.0
    %228 = vmatpush1.xpose.msra.mxu0 0.0
    %229 = vmatprep.subr.mxu0 0.0
    %230 = vmatpush1.xpose.msra.mxu0 0.0
    %231 = vmatprep.subr.mxu0 0.0
    %232 = vmatpush1.xpose.msra.mxu0 0.0
    %233 = vmatprep.subr.mxu0 0.0
    %234 = vmatpush1.xpose.msra.mxu0 0.0
    %235 = vmatprep.subr.mxu0 0.0
    %236 = vmatpush1.xpose.msra.mxu0 0.0
    %237 = vmatprep.subr.mxu0 0.0
    %238 = vmatpush1.xpose.msra.mxu0 0.0
    %239 = vmatprep.subr.mxu0 0.0
    %240 = vmatpush1.xpose.msra.mxu0 0.0
    %241 = vmatprep.mubr.f32.mxu0 0.0
    %242 = vmatmul.mubr.f32.gmra.mrb[0].mxu0 %v169
    %v243 = vpop.f32.mrb[0].mxu0
    %v244 = vadd.f32 %v20, %v243
    %v245 = vpop.f32.mrb[0].mxu0
    %246 = vmatprep.mubr.f32.mxu0 0.0
    %247 = vmatmul.mubr.f32.gmra.mrb[0].mxu0 %v171
    %v248 = vpop.f32.mrb[0].mxu0
    %v249 = vadd.f32 %v21, %v248
    %v250 = vpop.f32.mrb[0].mxu0
    %251 = vdwg.mxu0
    %252 = vrot.lane.b32.xlu0 %v145, 120
    %v253 = vpop.permute.xlu0 %252
    %254 = vrot.lane.b32.xlu0 %v147, 120
    %v255 = vpop.permute.xlu0 %254
    %v256 = vsel %vm168, %v145, 0
    %v258 = vsel %vm168, %v147, 0
    %v260 = vsel %vm168, %v253, 0
    %v262 = vsel %vm168, %v255, 0
    %264 = vmatprep.subr.mxu0 0.0
    %265 = vmatpush1.xpose.msra.mxu0 %v260
    %266 = vmatprep.subr.mxu0 0.0
    %267 = vmatpush1.xpose.msra.mxu0 %v262
    %268 = vmatprep.subr.mxu0 0.0
    %269 = vmatpush1.xpose.msra.mxu0 0.0
    %270 = vmatprep.subr.mxu0 0.0
    %271 = vmatpush1.xpose.msra.mxu0 0.0
    %272 = vmatprep.subr.mxu0 0.0
    %273 = vmatpush1.xpose.msra.mxu0 0.0
    %274 = vmatprep.subr.mxu0 0.0
    %275 = vmatpush1.xpose.msra.mxu0 0.0
    %276 = vmatprep.subr.mxu0 0.0
    %277 = vmatpush1.xpose.msra.mxu0 0.0
    %278 = vmatprep.subr.mxu0 0.0
    %279 = vmatpush1.xpose.msra.mxu0 0.0
    %280 = vmatprep.subr.mxu0 0.0
    %281 = vmatpush1.xpose.msra.mxu0 0.0
    %282 = vmatprep.subr.mxu0 0.0
    %283 = vmatpush1.xpose.msra.mxu0 0.0
    %284 = vmatprep.subr.mxu0 0.0
    %285 = vmatpush1.xpose.msra.mxu0 0.0
    %286 = vmatprep.subr.mxu0 0.0
    %287 = vmatpush1.xpose.msra.mxu0 0.0
    %288 = vmatprep.subr.mxu0 0.0
    %289 = vmatpush1.xpose.msra.mxu0 0.0
    %290 = vmatprep.subr.mxu0 0.0
    %291 = vmatpush1.xpose.msra.mxu0 0.0
    %292 = vmatprep.subr.mxu0 0.0
    %293 = vmatpush1.xpose.msra.mxu0 0.0
    %294 = vmatprep.subr.mxu0 0.0
    %295 = vmatpush1.xpose.msra.mxu0 0.0
    %296 = vmatprep.subr.mxu0 0.0
    %297 = vmatpush1.xpose.msra.mxu0 0.0
    %298 = vmatprep.subr.mxu0 0.0
    %299 = vmatpush1.xpose.msra.mxu0 0.0
    %300 = vmatprep.subr.mxu0 0.0
    %301 = vmatpush1.xpose.msra.mxu0 0.0
    %302 = vmatprep.subr.mxu0 0.0
    %303 = vmatpush1.xpose.msra.mxu0 0.0
    %304 = vmatprep.subr.mxu0 0.0
    %305 = vmatpush1.xpose.msra.mxu0 0.0
    %306 = vmatprep.subr.mxu0 0.0
    %307 = vmatpush1.xpose.msra.mxu0 0.0
    %308 = vmatprep.subr.mxu0 0.0
    %309 = vmatpush1.xpose.msra.mxu0 0.0
    %310 = vmatprep.subr.mxu0 0.0
    %311 = vmatpush1.xpose.msra.mxu0 0.0
    %312 = vmatprep.subr.mxu0 0.0
    %313 = vmatpush1.xpose.msra.mxu0 0.0
    %314 = vmatprep.subr.mxu0 0.0
    %315 = vmatpush1.xpose.msra.mxu0 0.0
    %316 = vmatprep.subr.mxu0 0.0
    %317 = vmatpush1.xpose.msra.mxu0 0.0
    %318 = vmatprep.subr.mxu0 0.0
    %319 = vmatpush1.xpose.msra.mxu0 0.0
    %320 = vmatprep.subr.mxu0 0.0
    %321 = vmatpush1.xpose.msra.mxu0 0.0
    %322 = vmatprep.subr.mxu0 0.0
    %323 = vmatpush1.xpose.msra.mxu0 0.0
    %324 = vmatprep.subr.mxu0 0.0
    %325 = vmatpush1.xpose.msra.mxu0 0.0
    %326 = vmatprep.subr.mxu0 0.0
    %327 = vmatpush1.xpose.msra.mxu0 0.0
    %328 = vmatprep.mubr.f32.mxu0 0.0
    %329 = vmatmul.mubr.f32.gmra.mrb[0].mxu0 %v256
    %v330 = vpop.f32.mrb[0].mxu0
    %v331 = vadd.f32 %v22, %v330
    %v332 = vpop.f32.mrb[0].mxu0
    %333 = vmatprep.mubr.f32.mxu0 0.0
    %334 = vmatmul.mubr.f32.gmra.mrb[0].mxu0 %v258
    %v335 = vpop.f32.mrb[0].mxu0
    %v336 = vadd.f32 %v23, %v335
    %v337 = vpop.f32.mrb[0].mxu0
    %338 = vdwg.mxu0
    %339 = vrot.lane.b32.xlu0 %v158, 120
    %v340 = vpop.permute.xlu0 %339
    %341 = vrot.lane.b32.xlu0 %v159, 120
    %v342 = vpop.permute.xlu0 %341
    %v343 = vsel %vm168, %v158, 0
    %v345 = vsel %vm168, %v159, 0
    %v347 = vsel %vm168, %v340, 0
    %v349 = vsel %vm168, %v342, 0
    %351 = vmatprep.subr.mxu0 0.0
    %352 = vmatpush1.xpose.msra.mxu0 %v347
    %353 = vmatprep.subr.mxu0 0.0
    %354 = vmatpush1.xpose.msra.mxu0 %v349
    %355 = vmatprep.subr.mxu0 0.0
    %356 = vmatpush1.xpose.msra.mxu0 0.0
    %357 = vmatprep.subr.mxu0 0.0
    %358 = vmatpush1.xpose.msra.mxu0 0.0
    %359 = vmatprep.subr.mxu0 0.0
    %360 = vmatpush1.xpose.msra.mxu0 0.0
    %361 = vmatprep.subr.mxu0 0.0
    %362 = vmatpush1.xpose.msra.mxu0 0.0
    %363 = vmatprep.subr.mxu0 0.0
    %364 = vmatpush1.xpose.msra.mxu0 0.0
    %365 = vmatprep.subr.mxu0 0.0
    %366 = vmatpush1.xpose.msra.mxu0 0.0
    %367 = vmatprep.subr.mxu0 0.0
    %368 = vmatpush1.xpose.msra.mxu0 0.0
    %369 = vmatprep.subr.mxu0 0.0
    %370 = vmatpush1.xpose.msra.mxu0 0.0
    %371 = vmatprep.subr.mxu0 0.0
    %372 = vmatpush1.xpose.msra.mxu0 0.0
    %373 = vmatprep.subr.mxu0 0.0
    %374 = vmatpush1.xpose.msra.mxu0 0.0
    %375 = vmatprep.subr.mxu0 0.0
    %376 = vmatpush1.xpose.msra.mxu0 0.0
    %377 = vmatprep.subr.mxu0 0.0
    %378 = vmatpush1.xpose.msra.mxu0 0.0
    %379 = vmatprep.subr.mxu0 0.0
    %380 = vmatpush1.xpose.msra.mxu0 0.0
    %381 = vmatprep.subr.mxu0 0.0
    %382 = vmatpush1.xpose.msra.mxu0 0.0
    %383 = vmatprep.subr.mxu0 0.0
    %384 = vmatpush1.xpose.msra.mxu0 0.0
    %385 = vmatprep.subr.mxu0 0.0
    %386 = vmatpush1.xpose.msra.mxu0 0.0
    %387 = vmatprep.subr.mxu0 0.0
    %388 = vmatpush1.xpose.msra.mxu0 0.0
    %389 = vmatprep.subr.mxu0 0.0
    %390 = vmatpush1.xpose.msra.mxu0 0.0
    %391 = vmatprep.subr.mxu0 0.0
    %392 = vmatpush1.xpose.msra.mxu0 0.0
    %393 = vmatprep.subr.mxu0 0.0
    %394 = vmatpush1.xpose.msra.mxu0 0.0
    %395 = vmatprep.subr.mxu0 0.0
    %396 = vmatpush1.xpose.msra.mxu0 0.0
    %397 = vmatprep.subr.mxu0 0.0
    %398 = vmatpush1.xpose.msra.mxu0 0.0
    %399 = vmatprep.subr.mxu0 0.0
    %400 = vmatpush1.xpose.msra.mxu0 0.0
    %401 = vmatprep.subr.mxu0 0.0
    %402 = vmatpush1.xpose.msra.mxu0 0.0
    %403 = vmatprep.subr.mxu0 0.0
    %404 = vmatpush1.xpose.msra.mxu0 0.0
    %405 = vmatprep.subr.mxu0 0.0
    %406 = vmatpush1.xpose.msra.mxu0 0.0
    %407 = vmatprep.subr.mxu0 0.0
    %408 = vmatpush1.xpose.msra.mxu0 0.0
    %409 = vmatprep.subr.mxu0 0.0
    %410 = vmatpush1.xpose.msra.mxu0 0.0
    %411 = vmatprep.subr.mxu0 0.0
    %412 = vmatpush1.xpose.msra.mxu0 0.0
    %413 = vmatprep.subr.mxu0 0.0
    %414 = vmatpush1.xpose.msra.mxu0 0.0
    %415 = vmatprep.mubr.f32.mxu0 0.0
    %416 = vmatmul.mubr.f32.gmra.mrb[0].mxu0 %v343
    %v417 = vpop.f32.mrb[0].mxu0
    %v418 = vadd.f32 %v24, %v417
    %v419 = vpop.f32.mrb[0].mxu0
    %420 = vmatprep.mubr.f32.mxu0 0.0
    %421 = vmatmul.mubr.f32.gmra.mrb[0].mxu0 %v345
    %v422 = vpop.f32.mrb[0].mxu0
    %v423 = vadd.f32 %v25, %v422
    %v424 = vpop.f32.mrb[0].mxu0
    %425 = vdwg.mxu0
    %426 = vrot.lane.b32.xlu0 %v161, 120
    %v427 = vpop.permute.xlu0 %426
    %428 = vrot.lane.b32.xlu0 %v163, 120
    %v429 = vpop.permute.xlu0 %428
    %v430 = vsel %vm168, %v161, 0
    %v432 = vsel %vm168, %v163, 0
    %v434 = vsel %vm168, %v427, 0
    %v436 = vsel %vm168, %v429, 0
    %438 = vmatprep.subr.mxu0 0.0
    %439 = vmatpush1.xpose.msra.mxu0 %v434
    %440 = vmatprep.subr.mxu0 0.0
    %441 = vmatpush1.xpose.msra.mxu0 %v436
    %442 = vmatprep.subr.mxu0 0.0
    %443 = vmatpush1.xpose.msra.mxu0 0.0
    %444 = vmatprep.subr.mxu0 0.0
    %445 = vmatpush1.xpose.msra.mxu0 0.0
    %446 = vmatprep.subr.mxu0 0.0
    %447 = vmatpush1.xpose.msra.mxu0 0.0
    %448 = vmatprep.subr.mxu0 0.0
    %449 = vmatpush1.xpose.msra.mxu0 0.0
    %450 = vmatprep.subr.mxu0 0.0
    %451 = vmatpush1.xpose.msra.mxu0 0.0
    %452 = vmatprep.subr.mxu0 0.0
    %453 = vmatpush1.xpose.msra.mxu0 0.0
    %454 = vmatprep.subr.mxu0 0.0
    %455 = vmatpush1.xpose.msra.mxu0 0.0
    %456 = vmatprep.subr.mxu0 0.0
    %457 = vmatpush1.xpose.msra.mxu0 0.0
    %458 = vmatprep.subr.mxu0 0.0
    %459 = vmatpush1.xpose.msra.mxu0 0.0
    %460 = vmatprep.subr.mxu0 0.0
    %461 = vmatpush1.xpose.msra.mxu0 0.0
    %462 = vmatprep.subr.mxu0 0.0
    %463 = vmatpush1.xpose.msra.mxu0 0.0
    %464 = vmatprep.subr.mxu0 0.0
    %465 = vmatpush1.xpose.msra.mxu0 0.0
    %466 = vmatprep.subr.mxu0 0.0
    %467 = vmatpush1.xpose.msra.mxu0 0.0
    %468 = vmatprep.subr.mxu0 0.0
    %469 = vmatpush1.xpose.msra.mxu0 0.0
    %470 = vmatprep.subr.mxu0 0.0
    %471 = vmatpush1.xpose.msra.mxu0 0.0
    %472 = vmatprep.subr.mxu0 0.0
    %473 = vmatpush1.xpose.msra.mxu0 0.0
    %474 = vmatprep.subr.mxu0 0.0
    %475 = vmatpush1.xpose.msra.mxu0 0.0
    %476 = vmatprep.subr.mxu0 0.0
    %477 = vmatpush1.xpose.msra.mxu0 0.0
    %478 = vmatprep.subr.mxu0 0.0
    %479 = vmatpush1.xpose.msra.mxu0 0.0
    %480 = vmatprep.subr.mxu0 0.0
    %481 = vmatpush1.xpose.msra.mxu0 0.0
    %482 = vmatprep.subr.mxu0 0.0
    %483 = vmatpush1.xpose.msra.mxu0 0.0
    %484 = vmatprep.subr.mxu0 0.0
    %485 = vmatpush1.xpose.msra.mxu0 0.0
    %486 = vmatprep.subr.mxu0 0.0
    %487 = vmatpush1.xpose.msra.mxu0 0.0
    %488 = vmatprep.subr.mxu0 0.0
    %489 = vmatpush1.xpose.msra.mxu0 0.0
    %490 = vmatprep.subr.mxu0 0.0
    %491 = vmatpush1.xpose.msra.mxu0 0.0
    %492 = vmatprep.subr.mxu0 0.0
    %493 = vmatpush1.xpose.msra.mxu0 0.0
    %494 = vmatprep.subr.mxu0 0.0
    %495 = vmatpush1.xpose.msra.mxu0 0.0
    %496 = vmatprep.subr.mxu0 0.0
    %497 = vmatpush1.xpose.msra.mxu0 0.0
    %498 = vmatprep.subr.mxu0 0.0
    %499 = vmatpush1.xpose.msra.mxu0 0.0
    %500 = vmatprep.subr.mxu0 0.0
    %501 = vmatpush1.xpose.msra.mxu0 0.0
    %502 = vmatprep.mubr.f32.mxu0 0.0
    %503 = vmatmul.mubr.f32.gmra.mrb[0].mxu0 %v430
    %v504 = vpop.f32.mrb[0].mxu0
    %v505 = vadd.f32 %v26, %v504
    %v506 = vpop.f32.mrb[0].mxu0
    %507 = vmatprep.mubr.f32.mxu0 0.0
    %508 = vmatmul.mubr.f32.gmra.mrb[0].mxu0 %v432
    %v509 = vpop.f32.mrb[0].mxu0
    %v510 = vadd.f32 %v27, %v509
    %v511 = vpop.f32.mrb[0].mxu0
    %512 = vdwg.mxu0
    %vm513 = vcmask 130048
    %v514 = vsel %vm513, %v244, -inf
    %515 = vmax.xlane.f32.xlu0 %v514
    %v516 = vpop.xlane.xlu0 %515
    %v517 = vsel %vm513, %v249, -inf
    %518 = vmax.xlane.f32.xlu0 %v517
    %v519 = vpop.xlane.xlu0 %518
    %v520 = vsel %vm513, %v331, -inf
    %521 = vmax.xlane.f32.xlu0 %v520
    %v522 = vpop.xlane.xlu0 %521
    %v523 = vsel %vm513, %v336, -inf
    %524 = vmax.xlane.f32.xlu0 %v523
    %v525 = vpop.xlane.xlu0 %524
    %v526 = vsel %vm513, %v418, -inf
    %527 = vmax.xlane.f32.xlu0 %v526
    %v528 = vpop.xlane.xlu0 %527
    %v529 = vsel %vm513, %v423, -inf
    %530 = vmax.xlane.f32.xlu0 %v529
    %v531 = vpop.xlane.xlu0 %530
    %v532 = vsel %vm513, %v505, -inf
    %533 = vmax.xlane.f32.xlu0 %v532
    %v534 = vpop.xlane.xlu0 %533
    %v535 = vsel %vm513, %v510, -inf
    %536 = vmax.xlane.f32.xlu0 %v535
    %v537 = vpop.xlane.xlu0 %536
    %v538 = vsub.f32 %v244, %v516
    %v539 = vsub.f32 %v249, %v519
    %v540 = vsub.f32 %v331, %v522
    %v541 = vsub.f32 %v336, %v525
    %v542 = vsub.f32 %v418, %v528
    %v543 = vsub.f32 %v423, %v531
    %v544 = vsub.f32 %v505, %v534
    %v545 = vsub.f32 %v510, %v537
    %v546 = vmul.f32 %v538, 1.442695
    %v547 = vpow.pop %v546
    %v548 = vmul.f32 %v539, 1.442695
    %v549 = vpow.pop %v548
    %v550 = vmul.f32 %v540, 1.442695
    %v551 = vpow.pop %v550
    %v552 = vmul.f32 %v541, 1.442695
    %v553 = vpow.pop %v552
    %v554 = vmul.f32 %v542, 1.442695
    %v555 = vpow.pop %v554
    %v556 = vmul.f32 %v543, 1.442695
    %v557 = vpow.pop %v556
    %v558 = vmul.f32 %v544, 1.442695
    %v559 = vpow.pop %v558
    %v560 = vmul.f32 %v545, 1.442695
    %v561 = vpow.pop %v560
    %v562 = vsel %vm513, %v547, 0.0
    %563 = vadd.xlane.f32.xlu0 %v562
    %v564 = vpop.xlane.xlu0 %563
    %v565 = vsel %vm513, %v549, 0.0
    %566 = vadd.xlane.f32.xlu0 %v565
    %v567 = vpop.xlane.xlu0 %566
    %v568 = vsel %vm513, %v551, 0.0
    %569 = vadd.xlane.f32.xlu0 %v568
    %v570 = vpop.xlane.xlu0 %569
    %v571 = vsel %vm513, %v553, 0.0
    %572 = vadd.xlane.f32.xlu0 %v571
    %v573 = vpop.xlane.xlu0 %572
    %v574 = vsel %vm513, %v555, 0.0
    %575 = vadd.xlane.f32.xlu0 %v574
    %v576 = vpop.xlane.xlu0 %575
    %v577 = vsel %vm513, %v557, 0.0
    %578 = vadd.xlane.f32.xlu0 %v577
    %v579 = vpop.xlane.xlu0 %578
    %v580 = vsel %vm513, %v559, 0.0
    %581 = vadd.xlane.f32.xlu0 %v580
    %v582 = vpop.xlane.xlu0 %581
    %v583 = vsel %vm513, %v561, 0.0
    %584 = vadd.xlane.f32.xlu0 %v583
    %v585 = vpop.xlane.xlu0 %584
    %v586 = vrcp.pop %v564
    %v587 = vrcp.pop %v567
    %v588 = vrcp.pop %v570
    %v589 = vrcp.pop %v573
    %v590 = vrcp.pop %v576
    %v591 = vrcp.pop %v579
    %v592 = vrcp.pop %v582
    %v593 = vrcp.pop %v585
    %v594 = vmul.f32 %v547, %v586
    %v595 = vmul.f32 %v549, %v587
    %v596 = vmul.f32 %v551, %v588
    %v597 = vmul.f32 %v553, %v589
    %v598 = vmul.f32 %v555, %v590
    %v599 = vmul.f32 %v557, %v591
    %v600 = vmul.f32 %v559, %v592
    %v601 = vmul.f32 %v561, %v593
    %602 = vrot.lane.b32.xlu0 %v132, 112
    %v603 = vpop.permute.xlu0 %602
    %604 = vrot.lane.b32.xlu0 %v138, 112
    %v605 = vpop.permute.xlu0 %604
    %v609 = vsel %vm513, %v594, 0
    %v612 = vsel %vm513, %v595, 0
    %614 = vmatprep.subr.mxu0 0.0
    %615 = vmatpush1.msra.mxu0 %v603
    %616 = vmatprep.subr.mxu0 0.0
    %617 = vmatpush1.msra.mxu0 %v605
    %618 = vmatprep.subr.mxu0 0.0
    %619 = vmatpush1.msra.mxu0 0.0
    %620 = vmatprep.subr.mxu0 0.0
    %621 = vmatpush1.msra.mxu0 0.0
    %622 = vmatprep.subr.mxu0 0.0
    %623 = vmatpush1.msra.mxu0 0.0
    %624 = vmatprep.subr.mxu0 0.0
    %625 = vmatpush1.msra.mxu0 0.0
    %626 = vmatprep.subr.mxu0 0.0
    %627 = vmatpush1.msra.mxu0 0.0
    %628 = vmatprep.subr.mxu0 0.0
    %629 = vmatpush1.msra.mxu0 0.0
    %630 = vmatprep.subr.mxu0 0.0
    %631 = vmatpush1.msra.mxu0 0.0
    %632 = vmatprep.subr.mxu0 0.0
    %633 = vmatpush1.msra.mxu0 0.0
    %634 = vmatprep.subr.mxu0 0.0
    %635 = vmatpush1.msra.mxu0 0.0
    %636 = vmatprep.subr.mxu0 0.0
    %637 = vmatpush1.msra.mxu0 0.0
    %638 = vmatprep.subr.mxu0 0.0
    %639 = vmatpush1.msra.mxu0 0.0
    %640 = vmatprep.subr.mxu0 0.0
    %641 = vmatpush1.msra.mxu0 0.0
    %642 = vmatprep.subr.mxu0 0.0
    %643 = vmatpush1.msra.mxu0 0.0
    %644 = vmatprep.subr.mxu0 0.0
    %645 = vmatpush1.msra.mxu0 0.0
    %646 = vmatprep.subr.mxu0 0.0
    %647 = vmatpush1.msra.mxu0 0.0
    %648 = vmatprep.subr.mxu0 0.0
    %649 = vmatpush1.msra.mxu0 0.0
    %650 = vmatprep.subr.mxu0 0.0
    %651 = vmatpush1.msra.mxu0 0.0
    %652 = vmatprep.subr.mxu0 0.0
    %653 = vmatpush1.msra.mxu0 0.0
    %654 = vmatprep.subr.mxu0 0.0
    %655 = vmatpush1.msra.mxu0 0.0
    %656 = vmatprep.subr.mxu0 0.0
    %657 = vmatpush1.msra.mxu0 0.0
    %658 = vmatprep.subr.mxu0 0.0
    %659 = vmatpush1.msra.mxu0 0.0
    %660 = vmatprep.subr.mxu0 0.0
    %661 = vmatpush1.msra.mxu0 0.0
    %662 = vmatprep.subr.mxu0 0.0
    %663 = vmatpush1.msra.mxu0 0.0
    %664 = vmatprep.subr.mxu0 0.0
    %665 = vmatpush1.msra.mxu0 0.0
    %666 = vmatprep.subr.mxu0 0.0
    %667 = vmatpush1.msra.mxu0 0.0
    %668 = vmatprep.subr.mxu0 0.0
    %669 = vmatpush1.msra.mxu0 0.0
    %670 = vmatprep.subr.mxu0 0.0
    %671 = vmatpush1.msra.mxu0 0.0
    %672 = vmatprep.subr.mxu0 0.0
    %673 = vmatpush1.msra.mxu0 0.0
    %674 = vmatprep.subr.mxu0 0.0
    %675 = vmatpush1.msra.mxu0 0.0
    %676 = vmatprep.subr.mxu0 0.0
    %677 = vmatpush1.msra.mxu0 0.0
    %678 = vmatprep.mubr.f32.mxu0 0.0
    %679 = vmatmul.mubr.f32.gmra.mrb[0].mxu0 %v609
    %v680 = vpop.f32.mrb[0].mxu0
    %v681 = vadd.f32 0.0, %v680
    %v682 = vpop.f32.mrb[0].mxu0
    %683 = vmatprep.mubr.f32.mxu0 0.0
    %684 = vmatmul.mubr.f32.gmra.mrb[0].mxu0 %v612
    %v685 = vpop.f32.mrb[0].mxu0
    %v686 = vadd.f32 0.0, %v685
    %v687 = vpop.f32.mrb[0].mxu0
    %688 = vdwg.mxu0
    %689 = vrot.lane.b32.xlu0 %v145, 112
    %v690 = vpop.permute.xlu0 %689
    %691 = vrot.lane.b32.xlu0 %v147, 112
    %v692 = vpop.permute.xlu0 %691
    %v696 = vsel %vm513, %v596, 0
    %v699 = vsel %vm513, %v597, 0
    %701 = vmatprep.subr.mxu0 0.0
    %702 = vmatpush1.msra.mxu0 %v690
    %703 = vmatprep.subr.mxu0 0.0
    %704 = vmatpush1.msra.mxu0 %v692
    %705 = vmatprep.subr.mxu0 0.0
    %706 = vmatpush1.msra.mxu0 0.0
    %707 = vmatprep.subr.mxu0 0.0
    %708 = vmatpush1.msra.mxu0 0.0
    %709 = vmatprep.subr.mxu0 0.0
    %710 = vmatpush1.msra.mxu0 0.0
    %711 = vmatprep.subr.mxu0 0.0
    %712 = vmatpush1.msra.mxu0 0.0
    %713 = vmatprep.subr.mxu0 0.0
    %714 = vmatpush1.msra.mxu0 0.0
    %715 = vmatprep.subr.mxu0 0.0
    %716 = vmatpush1.msra.mxu0 0.0
    %717 = vmatprep.subr.mxu0 0.0
    %718 = vmatpush1.msra.mxu0 0.0
    %719 = vmatprep.subr.mxu0 0.0
    %720 = vmatpush1.msra.mxu0 0.0
    %721 = vmatprep.subr.mxu0 0.0
    %722 = vmatpush1.msra.mxu0 0.0
    %723 = vmatprep.subr.mxu0 0.0
    %724 = vmatpush1.msra.mxu0 0.0
    %725 = vmatprep.subr.mxu0 0.0
    %726 = vmatpush1.msra.mxu0 0.0
    %727 = vmatprep.subr.mxu0 0.0
    %728 = vmatpush1.msra.mxu0 0.0
    %729 = vmatprep.subr.mxu0 0.0
    %730 = vmatpush1.msra.mxu0 0.0
    %731 = vmatprep.subr.mxu0 0.0
    %732 = vmatpush1.msra.mxu0 0.0
    %733 = vmatprep.subr.mxu0 0.0
    %734 = vmatpush1.msra.mxu0 0.0
    %735 = vmatprep.subr.mxu0 0.0
    %736 = vmatpush1.msra.mxu0 0.0
    %737 = vmatprep.subr.mxu0 0.0
    %738 = vmatpush1.msra.mxu0 0.0
    %739 = vmatprep.subr.mxu0 0.0
    %740 = vmatpush1.msra.mxu0 0.0
    %741 = vmatprep.subr.mxu0 0.0
    %742 = vmatpush1.msra.mxu0 0.0
    %743 = vmatprep.subr.mxu0 0.0
    %744 = vmatpush1.msra.mxu0 0.0
    %745 = vmatprep.subr.mxu0 0.0
    %746 = vmatpush1.msra.mxu0 0.0
    %747 = vmatprep.subr.mxu0 0.0
    %748 = vmatpush1.msra.mxu0 0.0
    %749 = vmatprep.subr.mxu0 0.0
    %750 = vmatpush1.msra.mxu0 0.0
    %751 = vmatprep.subr.mxu0 0.0
    %752 = vmatpush1.msra.mxu0 0.0
    %753 = vmatprep.subr.mxu0 0.0
    %754 = vmatpush1.msra.mxu0 0.0
    %755 = vmatprep.subr.mxu0 0.0
    %756 = vmatpush1.msra.mxu0 0.0
    %757 = vmatprep.subr.mxu0 0.0
    %758 = vmatpush1.msra.mxu0 0.0
    %759 = vmatprep.subr.mxu0 0.0
    %760 = vmatpush1.msra.mxu0 0.0
    %761 = vmatprep.subr.mxu0 0.0
    %762 = vmatpush1.msra.mxu0 0.0
    %763 = vmatprep.subr.mxu0 0.0
    %764 = vmatpush1.msra.mxu0 0.0
    %765 = vmatprep.mubr.f32.mxu0 0.0
    %766 = vmatmul.mubr.f32.gmra.mrb[0].mxu0 %v696
    %v767 = vpop.f32.mrb[0].mxu0
    %v768 = vadd.f32 0.0, %v767
    %v769 = vpop.f32.mrb[0].mxu0
    %770 = vmatprep.mubr.f32.mxu0 0.0
    %771 = vmatmul.mubr.f32.gmra.mrb[0].mxu0 %v699
    %v772 = vpop.f32.mrb[0].mxu0
    %v773 = vadd.f32 0.0, %v772
    %v774 = vpop.f32.mrb[0].mxu0
    %775 = vdwg.mxu0
    %776 = vrot.lane.b32.xlu0 %v158, 112
    %v777 = vpop.permute.xlu0 %776
    %778 = vrot.lane.b32.xlu0 %v159, 112
    %v779 = vpop.permute.xlu0 %778
    %v783 = vsel %vm513, %v598, 0
    %v786 = vsel %vm513, %v599, 0
    %788 = vmatprep.subr.mxu0 0.0
    %789 = vmatpush1.msra.mxu0 %v777
    %790 = vmatprep.subr.mxu0 0.0
    %791 = vmatpush1.msra.mxu0 %v779
    %792 = vmatprep.subr.mxu0 0.0
    %793 = vmatpush1.msra.mxu0 0.0
    %794 = vmatprep.subr.mxu0 0.0
    %795 = vmatpush1.msra.mxu0 0.0
    %796 = vmatprep.subr.mxu0 0.0
    %797 = vmatpush1.msra.mxu0 0.0
    %798 = vmatprep.subr.mxu0 0.0
    %799 = vmatpush1.msra.mxu0 0.0
    %800 = vmatprep.subr.mxu0 0.0
    %801 = vmatpush1.msra.mxu0 0.0
    %802 = vmatprep.subr.mxu0 0.0
    %803 = vmatpush1.msra.mxu0 0.0
    %804 = vmatprep.subr.mxu0 0.0
    %805 = vmatpush1.msra.mxu0 0.0
    %806 = vmatprep.subr.mxu0 0.0
    %807 = vmatpush1.msra.mxu0 0.0
    %808 = vmatprep.subr.mxu0 0.0
    %809 = vmatpush1.msra.mxu0 0.0
    %810 = vmatprep.subr.mxu0 0.0
    %811 = vmatpush1.msra.mxu0 0.0
    %812 = vmatprep.subr.mxu0 0.0
    %813 = vmatpush1.msra.mxu0 0.0
    %814 = vmatprep.subr.mxu0 0.0
    %815 = vmatpush1.msra.mxu0 0.0
    %816 = vmatprep.subr.mxu0 0.0
    %817 = vmatpush1.msra.mxu0 0.0
    %818 = vmatprep.subr.mxu0 0.0
    %819 = vmatpush1.msra.mxu0 0.0
    %820 = vmatprep.subr.mxu0 0.0
    %821 = vmatpush1.msra.mxu0 0.0
    %822 = vmatprep.subr.mxu0 0.0
    %823 = vmatpush1.msra.mxu0 0.0
    %824 = vmatprep.subr.mxu0 0.0
    %825 = vmatpush1.msra.mxu0 0.0
    %826 = vmatprep.subr.mxu0 0.0
    %827 = vmatpush1.msra.mxu0 0.0
    %828 = vmatprep.subr.mxu0 0.0
    %829 = vmatpush1.msra.mxu0 0.0
    %830 = vmatprep.subr.mxu0 0.0
    %831 = vmatpush1.msra.mxu0 0.0
    %832 = vmatprep.subr.mxu0 0.0
    %833 = vmatpush1.msra.mxu0 0.0
    %834 = vmatprep.subr.mxu0 0.0
    %835 = vmatpush1.msra.mxu0 0.0
    %836 = vmatprep.subr.mxu0 0.0
    %837 = vmatpush1.msra.mxu0 0.0
    %838 = vmatprep.subr.mxu0 0.0
    %839 = vmatpush1.msra.mxu0 0.0
    %840 = vmatprep.subr.mxu0 0.0
    %841 = vmatpush1.msra.mxu0 0.0
    %842 = vmatprep.subr.mxu0 0.0
    %843 = vmatpush1.msra.mxu0 0.0
    %844 = vmatprep.subr.mxu0 0.0
    %845 = vmatpush1.msra.mxu0 0.0
    %846 = vmatprep.subr.mxu0 0.0
    %847 = vmatpush1.msra.mxu0 0.0
    %848 = vmatprep.subr.mxu0 0.0
    %849 = vmatpush1.msra.mxu0 0.0
    %850 = vmatprep.subr.mxu0 0.0
    %851 = vmatpush1.msra.mxu0 0.0
    %852 = vmatprep.mubr.f32.mxu0 0.0
    %853 = vmatmul.mubr.f32.gmra.mrb[0].mxu0 %v783
    %v854 = vpop.f32.mrb[0].mxu0
    %v855 = vadd.f32 0.0, %v854
    %v856 = vpop.f32.mrb[0].mxu0
    %857 = vmatprep.mubr.f32.mxu0 0.0
    %858 = vmatmul.mubr.f32.gmra.mrb[0].mxu0 %v786
    %v859 = vpop.f32.mrb[0].mxu0
    %v860 = vadd.f32 0.0, %v859
    %v861 = vpop.f32.mrb[0].mxu0
    %862 = vdwg.mxu0
    %863 = vrot.lane.b32.xlu0 %v161, 112
    %v864 = vpop.permute.xlu0 %863
    %865 = vrot.lane.b32.xlu0 %v163, 112
    %v866 = vpop.permute.xlu0 %865
    %v870 = vsel %vm513, %v600, 0
    %v873 = vsel %vm513, %v601, 0
    %875 = vmatprep.subr.mxu0 0.0
    %876 = vmatpush1.msra.mxu0 %v864
    %877 = vmatprep.subr.mxu0 0.0
    %878 = vmatpush1.msra.mxu0 %v866
    %879 = vmatprep.subr.mxu0 0.0
    %880 = vmatpush1.msra.mxu0 0.0
    %881 = vmatprep.subr.mxu0 0.0
    %882 = vmatpush1.msra.mxu0 0.0
    %883 = vmatprep.subr.mxu0 0.0
    %884 = vmatpush1.msra.mxu0 0.0
    %885 = vmatprep.subr.mxu0 0.0
    %886 = vmatpush1.msra.mxu0 0.0
    %887 = vmatprep.subr.mxu0 0.0
    %888 = vmatpush1.msra.mxu0 0.0
    %889 = vmatprep.subr.mxu0 0.0
    %890 = vmatpush1.msra.mxu0 0.0
    %891 = vmatprep.subr.mxu0 0.0
    %892 = vmatpush1.msra.mxu0 0.0
    %893 = vmatprep.subr.mxu0 0.0
    %894 = vmatpush1.msra.mxu0 0.0
    %895 = vmatprep.subr.mxu0 0.0
    %896 = vmatpush1.msra.mxu0 0.0
    %897 = vmatprep.subr.mxu0 0.0
    %898 = vmatpush1.msra.mxu0 0.0
    %899 = vmatprep.subr.mxu0 0.0
    %900 = vmatpush1.msra.mxu0 0.0
    %901 = vmatprep.subr.mxu0 0.0
    %902 = vmatpush1.msra.mxu0 0.0
    %903 = vmatprep.subr.mxu0 0.0
    %904 = vmatpush1.msra.mxu0 0.0
    %905 = vmatprep.subr.mxu0 0.0
    %906 = vmatpush1.msra.mxu0 0.0
    %907 = vmatprep.subr.mxu0 0.0
    %908 = vmatpush1.msra.mxu0 0.0
    %909 = vmatprep.subr.mxu0 0.0
    %910 = vmatpush1.msra.mxu0 0.0
    %911 = vmatprep.subr.mxu0 0.0
    %912 = vmatpush1.msra.mxu0 0.0
    %913 = vmatprep.subr.mxu0 0.0
    %914 = vmatpush1.msra.mxu0 0.0
    %915 = vmatprep.subr.mxu0 0.0
    %916 = vmatpush1.msra.mxu0 0.0
    %917 = vmatprep.subr.mxu0 0.0
    %918 = vmatpush1.msra.mxu0 0.0
    %919 = vmatprep.subr.mxu0 0.0
    %920 = vmatpush1.msra.mxu0 0.0
    %921 = vmatprep.subr.mxu0 0.0
    %922 = vmatpush1.msra.mxu0 0.0
    %923 = vmatprep.subr.mxu0 0.0
    %924 = vmatpush1.msra.mxu0 0.0
    %925 = vmatprep.subr.mxu0 0.0
    %926 = vmatpush1.msra.mxu0 0.0
    %927 = vmatprep.subr.mxu0 0.0
    %928 = vmatpush1.msra.mxu0 0.0
    %929 = vmatprep.subr.mxu0 0.0
    %930 = vmatpush1.msra.mxu0 0.0
    %931 = vmatprep.subr.mxu0 0.0
    %932 = vmatpush1.msra.mxu0 0.0
    %933 = vmatprep.subr.mxu0 0.0
    %934 = vmatpush1.msra.mxu0 0.0
    %935 = vmatprep.subr.mxu0 0.0
    %936 = vmatpush1.msra.mxu0 0.0
    %937 = vmatprep.subr.mxu0 0.0
    %938 = vmatpush1.msra.mxu0 0.0
    %939 = vmatprep.mubr.f32.mxu0 0.0
    %940 = vmatmul.mubr.f32.gmra.mrb[0].mxu0 %v870
    %v941 = vpop.f32.mrb[0].mxu0
    %v942 = vadd.f32 0.0, %v941
    %v943 = vpop.f32.mrb[0].mxu0
    %944 = vmatprep.mubr.f32.mxu0 0.0
    %945 = vmatmul.mubr.f32.gmra.mrb[0].mxu0 %v873
    %v946 = vpop.f32.mrb[0].mxu0
    %v947 = vadd.f32 0.0, %v946
    %v948 = vpop.f32.mrb[0].mxu0
    %949 = vdwg.mxu0
    %v950 = vadd.f32 %v681, %v768
    %v951 = vadd.f32 %v686, %v773
    %v952 = vadd.f32 %v950, %v855
    %v953 = vadd.f32 %v951, %v860
    %v954 = vadd.f32 %v952, %v942
    %v955 = vadd.f32 %v953, %v947
    %v956 = vlaneseq
    %v957 = vshrl.u32 %v956, 7
    %v958 = vsub.s32 1, %v957
    %v959 = vrot.slane %v48, %v958
    %v960 = vadd.f32 %v954, %v959
    %v961 = vadd.f32 %v955, %v959
    %v962 = vadd.f32 %v960, %v18
    %v963 = vadd.f32 %v961, %v19
    %v964 = vsel %vm58, %v962, 0.0
    %965 = vadd.xlane.f32.xlu0 %v964
    %v966 = vpop.xlane.xlu0 %965
    %v967 = vsel %vm58, %v963, 0.0
    %968 = vadd.xlane.f32.xlu0 %v967
    %v969 = vpop.xlane.xlu0 %968
    %v970 = vrcp.pop 32.0
    %v971 = vmul.f32 %v966, %v970
    %v972 = vmul.f32 %v969, %v970
    %v973 = vsub.f32 %v962, %v971
    %v974 = vsub.f32 %v963, %v972
    %v975 = vmul.f32 %v973, %v973
    %v976 = vmul.f32 %v974, %v974
    %v977 = vsel %vm58, %v975, 0.0
    %978 = vadd.xlane.f32.xlu0 %v977
    %v979 = vpop.xlane.xlu0 %978
    %v980 = vsel %vm58, %v976, 0.0
    %981 = vadd.xlane.f32.xlu0 %v980
    %v982 = vpop.xlane.xlu0 %981
    %v983 = vmul.f32 %v979, %v970
    %v984 = vmul.f32 %v982, %v970
    %v985 = vadd.f32 %v983, 1e-05
    %v986 = vadd.f32 %v984, 1e-05
    %v987 = vrsqrt.pop %v985
    %v988 = vrsqrt.pop %v986
    %v989 = vmul.f32 %v973, %v987
    %v990 = vmul.f32 %v974, %v988
    %v991 = vlaneseq
    %v992 = vshrl.u32 %v991, 7
    %v993 = vsub.s32 2, %v992
    %v994 = vrot.slane %v48, %v993
    %v995 = vmul.f32 %v989, %v994
    %v996 = vmul.f32 %v990, %v994
    %v997 = vlaneseq
    %v998 = vshrl.u32 %v997, 7
    %v999 = vsub.s32 3, %v998
    %v1000 = vrot.slane %v48, %v999
    %v1001 = vadd.f32 %v995, %v1000
    %v1002 = vadd.f32 %v996, %v1000
    %v1003 = vlaneseq
    %v1004 = vshrl.u32 %v1003, 7
    %v1005 = vsub.s32 4, %v1004
    %v1006 = vrot.slane %v48, %v1005
    %v1008 = vsel %vm58, %v1001, 0
    %v1011 = vsel %vm58, %v1002, 0
    %1013 = vmatprep.subr.mxu0 0.0
    %1014 = vmatpush1.msra.mxu0 %v36
    %1015 = vmatprep.subr.mxu0 0.0
    %1016 = vmatpush1.msra.mxu0 %v37
    %1017 = vmatprep.subr.mxu0 0.0
    %1018 = vmatpush1.msra.mxu0 %v38
    %1019 = vmatprep.subr.mxu0 0.0
    %1020 = vmatpush1.msra.mxu0 %v39
    %1021 = vmatprep.subr.mxu0 0.0
    %1022 = vmatpush1.msra.mxu0 0.0
    %1023 = vmatprep.subr.mxu0 0.0
    %1024 = vmatpush1.msra.mxu0 0.0
    %1025 = vmatprep.subr.mxu0 0.0
    %1026 = vmatpush1.msra.mxu0 0.0
    %1027 = vmatprep.subr.mxu0 0.0
    %1028 = vmatpush1.msra.mxu0 0.0
    %1029 = vmatprep.subr.mxu0 0.0
    %1030 = vmatpush1.msra.mxu0 0.0
    %1031 = vmatprep.subr.mxu0 0.0
    %1032 = vmatpush1.msra.mxu0 0.0
    %1033 = vmatprep.subr.mxu0 0.0
    %1034 = vmatpush1.msra.mxu0 0.0
    %1035 = vmatprep.subr.mxu0 0.0
    %1036 = vmatpush1.msra.mxu0 0.0
    %1037 = vmatprep.subr.mxu0 0.0
    %1038 = vmatpush1.msra.mxu0 0.0
    %1039 = vmatprep.subr.mxu0 0.0
    %1040 = vmatpush1.msra.mxu0 0.0
    %1041 = vmatprep.subr.mxu0 0.0
    %1042 = vmatpush1.msra.mxu0 0.0
    %1043 = vmatprep.subr.mxu0 0.0
    %1044 = vmatpush1.msra.mxu0 0.0
    %1045 = vmatprep.subr.mxu0 0.0
    %1046 = vmatpush1.msra.mxu0 0.0
    %1047 = vmatprep.subr.mxu0 0.0
    %1048 = vmatpush1.msra.mxu0 0.0
    %1049 = vmatprep.subr.mxu0 0.0
    %1050 = vmatpush1.msra.mxu0 0.0
    %1051 = vmatprep.subr.mxu0 0.0
    %1052 = vmatpush1.msra.mxu0 0.0
    %1053 = vmatprep.subr.mxu0 0.0
    %1054 = vmatpush1.msra.mxu0 0.0
    %1055 = vmatprep.subr.mxu0 0.0
    %1056 = vmatpush1.msra.mxu0 0.0
    %1057 = vmatprep.subr.mxu0 0.0
    %1058 = vmatpush1.msra.mxu0 0.0
    %1059 = vmatprep.subr.mxu0 0.0
    %1060 = vmatpush1.msra.mxu0 0.0
    %1061 = vmatprep.subr.mxu0 0.0
    %1062 = vmatpush1.msra.mxu0 0.0
    %1063 = vmatprep.subr.mxu0 0.0
    %1064 = vmatpush1.msra.mxu0 0.0
    %1065 = vmatprep.subr.mxu0 0.0
    %1066 = vmatpush1.msra.mxu0 0.0
    %1067 = vmatprep.subr.mxu0 0.0
    %1068 = vmatpush1.msra.mxu0 0.0
    %1069 = vmatprep.subr.mxu0 0.0
    %1070 = vmatpush1.msra.mxu0 0.0
    %1071 = vmatprep.subr.mxu0 0.0
    %1072 = vmatpush1.msra.mxu0 0.0
    %1073 = vmatprep.subr.mxu0 0.0
    %1074 = vmatpush1.msra.mxu0 0.0
    %1075 = vmatprep.subr.mxu0 0.0
    %1076 = vmatpush1.msra.mxu0 0.0
    %1077 = vmatprep.mubr.f32.mxu0 0.0
    %1078 = vmatmul.mubr.f32.gmra.mrb[0].mxu0 %v1008
    %v1079 = vpop.f32.mrb[0].mxu0
    %v1080 = vadd.f32 %v1006, %v1079
    %v1081 = vpop.f32.mrb[0].mxu0
    %1082 = vmatprep.mubr.f32.mxu0 0.0
    %1083 = vmatmul.mubr.f32.gmra.mrb[0].mxu0 %v1011
    %v1084 = vpop.f32.mrb[0].mxu0
    %v1085 = vadd.f32 %v1006, %v1084
    %v1086 = vpop.f32.mrb[0].mxu0
    %1087 = vdwg.mxu0
    %v1088 = vmax.f32 %v1080, 0.0
    %v1089 = vmax.f32 %v1085, 0.0
    %v1090 = vlaneseq
    %v1091 = vshrl.u32 %v1090, 7
    %v1092 = vsub.s32 5, %v1091
    %v1093 = vrot.slane %v48, %v1092
    %vm1094 = vcmask 523264
    %v1096 = vsel %vm1094, %v1088, 0
    %v1099 = vsel %vm1094, %v1089, 0
    %1101 = vmatprep.subr.mxu0 0.0
    %1102 = vmatpush1.msra.mxu0 %v40
    %1103 = vmatprep.subr.mxu0 0.0
    %1104 = vmatpush1.msra.mxu0 %v41
    %1105 = vmatprep.subr.mxu0 0.0
    %1106 = vmatpush1.msra.mxu0 %v42
    %1107 = vmatprep.subr.mxu0 0.0
    %1108 = vmatpush1.msra.mxu0 %v43
    %1109 = vmatprep.subr.mxu0 0.0
    %1110 = vmatpush1.msra.mxu0 %v44
    %1111 = vmatprep.subr.mxu0 0.0
    %1112 = vmatpush1.msra.mxu0 %v45
    %1113 = vmatprep.subr.mxu0 0.0
    %1114 = vmatpush1.msra.mxu0 %v46
    %1115 = vmatprep.subr.mxu0 0.0
    %1116 = vmatpush1.msra.mxu0 %v47
    %1117 = vmatprep.subr.mxu0 0.0
    %1118 = vmatpush1.msra.mxu0 0.0
    %1119 = vmatprep.subr.mxu0 0.0
    %1120 = vmatpush1.msra.mxu0 0.0
    %1121 = vmatprep.subr.mxu0 0.0
    %1122 = vmatpush1.msra.mxu0 0.0
    %1123 = vmatprep.subr.mxu0 0.0
    %1124 = vmatpush1.msra.mxu0 0.0
    %1125 = vmatprep.subr.mxu0 0.0
    %1126 = vmatpush1.msra.mxu0 0.0
    %1127 = vmatprep.subr.mxu0 0.0
    %1128 = vmatpush1.msra.mxu0 0.0
    %1129 = vmatprep.subr.mxu0 0.0
    %1130 = vmatpush1.msra.mxu0 0.0
    %1131 = vmatprep.subr.mxu0 0.0
    %1132 = vmatpush1.msra.mxu0 0.0
    %1133 = vmatprep.subr.mxu0 0.0
    %1134 = vmatpush1.msra.mxu0 0.0
    %1135 = vmatprep.subr.mxu0 0.0
    %1136 = vmatpush1.msra.mxu0 0.0
    %1137 = vmatprep.subr.mxu0 0.0
    %1138 = vmatpush1.msra.mxu0 0.0
    %1139 = vmatprep.subr.mxu0 0.0
    %1140 = vmatpush1.msra.mxu0 0.0
    %1141 = vmatprep.subr.mxu0 0.0
    %1142 = vmatpush1.msra.mxu0 0.0
    %1143 = vmatprep.subr.mxu0 0.0
    %1144 = vmatpush1.msra.mxu0 0.0
    %1145 = vmatprep.subr.mxu0 0.0
    %1146 = vmatpush1.msra.mxu0 0.0
    %1147 = vmatprep.subr.mxu0 0.0
    %1148 = vmatpush1.msra.mxu0 0.0
    %1149 = vmatprep.subr.mxu0 0.0
    %1150 = vmatpush1.msra.mxu0 0.0
    %1151 = vmatprep.subr.mxu0 0.0
    %1152 = vmatpush1.msra.mxu0 0.0
    %1153 = vmatprep.subr.mxu0 0.0
    %1154 = vmatpush1.msra.mxu0 0.0
    %1155 = vmatprep.subr.mxu0 0.0
    %1156 = vmatpush1.msra.mxu0 0.0
    %1157 = vmatprep.subr.mxu0 0.0
    %1158 = vmatpush1.msra.mxu0 0.0
    %1159 = vmatprep.subr.mxu0 0.0
    %1160 = vmatpush1.msra.mxu0 0.0
    %1161 = vmatprep.subr.mxu0 0.0
    %1162 = vmatpush1.msra.mxu0 0.0
    %1163 = vmatprep.subr.mxu0 0.0
    %1164 = vmatpush1.msra.mxu0 0.0
    %1165 = vmatprep.mubr.f32.mxu0 0.0
    %1166 = vmatmul.mubr.f32.gmra.mrb[0].mxu0 %v1096
    %v1167 = vpop.f32.mrb[0].mxu0
    %v1168 = vadd.f32 %v1093, %v1167
    %v1169 = vpop.f32.mrb[0].mxu0
    %1170 = vmatprep.mubr.f32.mxu0 0.0
    %1171 = vmatmul.mubr.f32.gmra.mrb[0].mxu0 %v1099
    %v1172 = vpop.f32.mrb[0].mxu0
    %v1173 = vadd.f32 %v1093, %v1172
    %v1174 = vpop.f32.mrb[0].mxu0
    %1175 = vdwg.mxu0
    %v1176 = vadd.f32 %v1168, %v1001
    %v1177 = vadd.f32 %v1173, %v1002
    %v1178 = vsel %vm58, %v1176, 0.0
    %1179 = vadd.xlane.f32.xlu0 %v1178
    %v1180 = vpop.xlane.xlu0 %1179
    %v1181 = vsel %vm58, %v1177, 0.0
    %1182 = vadd.xlane.f32.xlu0 %v1181
    %v1183 = vpop.xlane.xlu0 %1182
    %v1184 = vmul.f32 %v1180, %v970
    %v1185 = vmul.f32 %v1183, %v970
    %v1186 = vsub.f32 %v1176, %v1184
    %v1187 = vsub.f32 %v1177, %v1185
    %v1188 = vmul.f32 %v1186, %v1186
    %v1189 = vmul.f32 %v1187, %v1187
    %v1190 = vsel %vm58, %v1188, 0.0
    %1191 = vadd.xlane.f32.xlu0 %v1190
    %v1192 = vpop.xlane.xlu0 %1191
    %v1193 = vsel %vm58, %v1189, 0.0
    %1194 = vadd.xlane.f32.xlu0 %v1193
    %v1195 = vpop.xlane.xlu0 %1194
    %v1196 = vmul.f32 %v1192, %v970
    %v1197 = vmul.f32 %v1195, %v970
    %v1198 = vadd.f32 %v1196, 1e-05
    %v1199 = vadd.f32 %v1197, 1e-05
    %v1200 = vrsqrt.pop %v1198
    %v1201 = vrsqrt.pop %v1199
    %v1202 = vmul.f32 %v1186, %v1200
    %v1203 = vmul.f32 %v1187, %v1201
    %v1204 = vlaneseq
    %v1205 = vshrl.u32 %v1204, 7
    %v1206 = vsub.s32 6, %v1205
    %v1207 = vrot.slane %v48, %v1206
    %v1208 = vmul.f32 %v1202, %v1207
    %v1209 = vmul.f32 %v1203, %v1207
    %v1210 = vlaneseq
    %v1211 = vshrl.u32 %v1210, 7
    %v1212 = vsub.s32 7, %v1211
    %v1213 = vrot.slane %v48, %v1212
    %v1214 = vadd.f32 %v1208, %v1213
    %v1215 = vadd.f32 %v1209, %v1213
    %1216 = vst.msk [vmem:[#allocation2] sm:$0xff] %vm58, %v1214
    %1217 = vst.msk [vmem:[#allocation2 + $0x8] sm:$0xff] %vm58, %v1215
    // Predicated region
    $region18: #{tpu_custom_call.1} parent=1 // pred_check
      _
    $region19: #{tpu_custom_call.1} parent=1 // pred_check_branch
      %1219 = sbr.rel (0) target = $region21
    $region20: #{tpu_custom_call.1} parent=1 // pred_region
      %s1221 = ssub.s32 256, 256
      %1222 = vsyncadd [#allocation3], %s1221
      %s1223 = sshll.u32 [#allocation2], 4
      %s1224 = int_to_ptr.vmem [resolvable:$true] %s1223
      %1229 = dma.vmem_to_hbm [thread:$0]  %s1224, 256, %s4, [#allocation3], 128, 128, 8
    $region21: #{tpu_custom_call.1} parent=1 // pred_fallthru
      _
    // Predicated region
    $region22: #{tpu_custom_call.1} parent=1 // pred_check
      _
    $region23: #{tpu_custom_call.1} parent=1 // pred_check_branch
      %1231 = sbr.rel (0) target = $region25
    $region24: #{tpu_custom_call.1} parent=1 // pred_region
      %1232 = dma.done [#allocation3], 256
    $region25: #{tpu_custom_call.1} parent=1 // pred_fallthru
      _
    %1233 = vsyncpa [#allocation3], 1

</llo_original>
